<compile_context>
chip_gen: v5e
topology: v5e:2x2
jax: 0.10.0
libtpu: 0.0.40
codegen_flags: <defaults>
</compile_context>

<pallas_src>
import math
import functools

import jax
import jax.numpy as jnp
from jax.experimental import pallas as pl
from jax.experimental.pallas import tpu as pltpu


# -----------------------------------------------------------------------------
# Fused encoder-stack kernel. Grid = (batch_blocks, num_layers); the residual
# stream for the current batch block is resident in VMEM scratch across layers.
# -----------------------------------------------------------------------------
def encoder_stack_kernel(
    x_ref, mask_ref, pe_ref,
    wqkv_ref, bqkv_ref, wo_ref, bo_ref,
    ln1g_ref, ln1b_ref,
    w1_ref, b1_ref, w2_ref, b2_ref,
    ln2g_ref, ln2b_ref,
    out_ref, resid_ref,
    *, num_heads, d_head, block_b, seq_len, embed_scale,
):
    f32, bf16 = jnp.float32, jnp.bfloat16
    H, Dh, S, Bb = num_heads, d_head, seq_len, block_b
    D = H * Dh
    M = Bb * S              # rows fed to every MXU call
    G = H * Bb              # batched (head, batch-elem) dim for scores/context
    layer = pl.program_id(1)

    # Layer 0: fuse embedding scale + positional-encoding add into the resident residual.
    @pl.when(layer == 0)
    def _():
        pe = jnp.tile(pe_ref[...], (Bb, 1))               # (M, D)
        resid_ref[...] = x_ref[...] * embed_scale + pe

    x = resid_ref[...]                                    # (M, D) f32 residual stream
    xb = x.astype(bf16)

    # ---- fused QKV projection: one lane-dense matmul (M, D) @ (D, 3D) -------
    qkv = (jnp.dot(xb, wqkv_ref[0], preferred_element_type=f32)
           + bqkv_ref[0]).astype(bf16)                    # (M, 3D)

    def split_heads(base):
        # (M, 3D) -> (G, S, Dh): static lane slices per head, stacked on a leading batch dim.
        hs = jnp.stack([qkv[:, base + h * Dh: base + (h + 1) * Dh] for h in range(H)],
                       axis=0)                            # (H, M, Dh)
        return hs.reshape(G, S, Dh)

    q = split_heads(0)
    k = split_heads(D)
    v = split_heads(2 * D)

    # ---- scaled dot-product attention, batched over (head, batch-elem) ------
    # Additive bias built in-kernel from the compact bf16 0/1 mask (cheap VPU work).
    bias = jnp.where(mask_ref[...] == 0, -1e9, 0.0).astype(f32)        # (Bb, S, S)
    bias = jnp.broadcast_to(bias[None], (H, Bb, S, S)).reshape(G, S, S)

    inv_sqrt_dh = 1.0 / math.sqrt(float(Dh))
    scores = jnp.einsum("gqe,gke->gqk", q, k,
                        preferred_element_type=f32) * inv_sqrt_dh + bias
    # TODO(synk): flash-style online softmax over K tiles before scaling S (dense (G,S,S) f32
    #             scores would exceed v7x's 64 MiB VMEM at large S).
    m = jnp.max(scores, axis=-1, keepdims=True)
    e = jnp.exp(scores - m)
    p = e * pl.reciprocal(jnp.sum(e, axis=-1, keepdims=True), approx=True)

    ctx = jnp.einsum("gqk,gke->gqe", p.astype(bf16), v,
                     preferred_element_type=f32)          # (G, S, Dh)

    # ---- concat heads back onto lanes, project once with K = D --------------
    ctx_h = ctx.astype(bf16).reshape(H, M, Dh)
    ctx_cat = jnp.concatenate([ctx_h[h] for h in range(H)], axis=-1)   # (M, D)
    attn = jnp.dot(ctx_cat, wo_ref[0], preferred_element_type=f32) + bo_ref[0]

    # ---- Add & LayerNorm, FFN, Add & LayerNorm (f32 residual stream) --------
    def layer_norm(t, g, b):
        mu = jnp.mean(t, axis=-1, keepdims=True)
        c = t - mu
        var = jnp.mean(c * c, axis=-1, keepdims=True)
        return c * jax.lax.rsqrt(var + 1e-5) * g + b

    y = layer_norm(x + attn, ln1g_ref[0], ln1b_ref[0])
    h1 = jnp.maximum(
        jnp.dot(y.astype(bf16), w1_ref[0], preferred_element_type=f32) + b1_ref[0], 0.0)
    ffn = jnp.dot(h1.astype(bf16), w2_ref[0], preferred_element_type=f32) + b2_ref[0]
    z = layer_norm(y + ffn, ln2g_ref[0], ln2b_ref[0])

    resid_ref[...] = z

    @pl.when(layer == pl.num_programs(1) - 1)
    def _():
        out_ref[...] = z.astype(out_ref.dtype)


# -----------------------------------------------------------------------------
# Wrapper: tiling choice, VMEM cap per generation, cost estimate, pallas_call
# -----------------------------------------------------------------------------
def _choose_block_b(B, S, target_rows=256):
    """Batch elements per grid step: aim for ~target_rows MXU rows per matmul while keeping
    >=2 parallel batch blocks so both v7x TensorCores can be used."""
    bb = max(1, min(B, target_rows // max(S, 1)))
    if B >= 2:
        bb = min(bb, max(1, B // 2))
    while B % bb:
        bb -= 1
    return bb


def _vmem_limit_bytes():
    # ~75% of physical VMEM: ~48 MiB on v7x (64 MiB), ~96 MiB on v5e/v6e (128 MiB).
    try:
        return int(pltpu.get_tpu_info().vmem_capacity_bytes * 3 // 4)
    except Exception:
        return 48 * 1024 * 1024   # conservative fallback, valid on every generation


def _cost_estimate(B, S, D, H, d_ff, L):
    Dh = D // H
    matmul_flops = 2 * B * S * (3 * D * D + D * D + 2 * D * d_ff)
    attn_flops = 2 * B * H * S * S * Dh * 2
    flops = L * (matmul_flops + attn_flops)
    transcendentals = L * B * (H * S * S + 2 * S)
    bytes_accessed = (
        4 * B * S * D * 2                                  # activations in + out (f32)
        + 2 * B * S * S                                    # bf16 mask
        + 4 * S * D                                        # positional encoding
        + L * 2 * (3 * D * D + D * D + 2 * D * d_ff)       # bf16 weights
        + L * 4 * (3 * D + D + d_ff + 5 * D))              # f32 biases + LN params
    return pl.CostEstimate(flops=int(flops), transcendentals=int(transcendentals),
                           bytes_accessed=int(bytes_accessed))


def run_encoder_stack(x2, mask, pe, st, *, batch, seq_len, d_model, num_heads, d_ff,
                      embed_scale):
    """x2: (B*S, D) f32; mask: (B, S, S) bf16 0/1; pe: (S, D) f32; st: stacked layer params."""
    B, S, D = batch, seq_len, d_model
    L = st["wqkv"].shape[0]
    # TODO(synk): pad the sequence to a multiple of 8 to support arbitrary seq lengths.
    assert S % 8 == 0, "seq_len must be a multiple of 8"
    bb = _choose_block_b(B, S)
    nb = B // bb
    M = bb * S

    weights = [st["wqkv"], st["bqkv"], st["wo"], st["bo"],
               st["ln1_g"], st["ln1_b"],
               st["w1"], st["b1"], st["w2"], st["b2"],
               st["ln2_g"], st["ln2_b"]]

    in_specs = [
        pl.BlockSpec((M, D), lambda b, l: (b, 0)),          # residual-stream input rows
        pl.BlockSpec((bb, S, S), lambda b, l: (b, 0, 0)),   # compact bf16 mask
        pl.BlockSpec((S, D), lambda b, l: (0, 0)),          # positional encoding
    ] + [pl.BlockSpec((1,) + w.shape[1:], lambda b, l: (l, 0, 0)) for w in weights]

    kernel = functools.partial(
        encoder_stack_kernel,
        num_heads=num_heads, d_head=D // num_heads,
        block_b=bb, seq_len=S, embed_scale=embed_scale)

    return pl.pallas_call(
        kernel,
        out_shape=jax.ShapeDtypeStruct((B * S, D), jnp.float32),
        grid=(nb, L),
        in_specs=in_specs,
        out_specs=pl.BlockSpec((M, D), lambda b, l: (b, 0)),
        scratch_shapes=[pltpu.VMEM((M, D), jnp.float32)],   # resident residual stream
        compiler_params=pltpu.CompilerParams(
            dimension_semantics=("parallel", "arbitrary"),
            vmem_limit_bytes=_vmem_limit_bytes(),
        ),
        cost_estimate=_cost_estimate(B, S, D, num_heads, d_ff, L),
    )(x2, mask, pe, *weights)


# -----------------------------------------------------------------------------
# Parameter init / layout prep + full Encoder forward
# -----------------------------------------------------------------------------
def sinusoidal_pe(max_len, d_model):
    pos = jnp.arange(max_len, dtype=jnp.float32)[:, None]
    i = jnp.arange(0, d_model, 2, dtype=jnp.float32)
    div = jnp.exp(-math.log(10000.0) * i / d_model)
    pe = jnp.zeros((max_len, d_model), jnp.float32)
    pe = pe.at[:, 0::2].set(jnp.sin(pos * div))
    pe = pe.at[:, 1::2].set(jnp.cos(pos * div))
    return pe


def init_params(key, num_layers, d_model, d_ff, vocab_size):
    keys = jax.random.split(key, 1 + num_layers)
    params = {
        "embedding": jax.random.normal(keys[0], (vocab_size, d_model), jnp.float32) * 0.02,
        "layers": [],
    }
    for l in range(num_layers):
        lk = jax.random.split(keys[1 + l], 6)
        s = 0.02
        params["layers"].append({
            "wq": jax.random.normal(lk[0], (d_model, d_model), jnp.float32) * s,
            "wk": jax.random.normal(lk[1], (d_model, d_model), jnp.float32) * s,
            "wv": jax.random.normal(lk[2], (d_model, d_model), jnp.float32) * s,
            "wo": jax.random.normal(lk[3], (d_model, d_model), jnp.float32) * s,
            "bq": jnp.zeros((1, d_model), jnp.float32),
            "bk": jnp.zeros((1, d_model), jnp.float32),
            "bv": jnp.zeros((1, d_model), jnp.float32),
            "bo": jnp.zeros((1, d_model), jnp.float32),
            "w1": jax.random.normal(lk[4], (d_model, d_ff), jnp.float32) * s,
            "b1": jnp.zeros((1, d_ff), jnp.float32),
            "w2": jax.random.normal(lk[5], (d_ff, d_model), jnp.float32) * s,
            "b2": jnp.zeros((1, d_model), jnp.float32),
            "ln1_g": jnp.ones((1, d_model), jnp.float32),
            "ln1_b": jnp.zeros((1, d_model), jnp.float32),
            "ln2_g": jnp.ones((1, d_model), jnp.float32),
            "ln2_b": jnp.zeros((1, d_model), jnp.float32),
        })
    return params


def prep_stacked_params(layer_params, compute_dtype=jnp.bfloat16):
    """One-time layout/dtype prep outside the kernel: fuse Wq|Wk|Wv into a single (D, 3D)
    weight per layer, stack all per-layer params on a leading layer axis and cast matmul
    weights to bf16 (f32 accumulation happens in-kernel)."""
    def stack(name):
        return jnp.stack([lp[name] for lp in layer_params], axis=0)
    wqkv = jnp.stack([jnp.concatenate([lp["wq"], lp["wk"], lp["wv"]], axis=1)
                      for lp in layer_params], axis=0).astype(compute_dtype)   # (L, D, 3D)
    bqkv = jnp.stack([jnp.concatenate([lp["bq"], lp["bk"], lp["bv"]], axis=1)
                      for lp in layer_params], axis=0)                          # (L, 1, 3D)
    return {
        "wqkv": wqkv, "bqkv": bqkv,
        "wo": stack("wo").astype(compute_dtype), "bo": stack("bo"),
        "ln1_g": stack("ln1_g"), "ln1_b": stack("ln1_b"),
        "w1": stack("w1").astype(compute_dtype), "b1": stack("b1"),
        "w2": stack("w2").astype(compute_dtype), "b2": stack("b2"),
        "ln2_g": stack("ln2_g"), "ln2_b": stack("ln2_b"),
    }


def encoder_forward(src, src_mask, params, *, d_model, num_heads, max_seq_length):
    """
    src:      (seq_len, batch) int32 token ids   (matches the torch docstring)
    src_mask: (batch, 1, seq_len, seq_len) or broadcastable, or None — 1 = attend, 0 = masked
    returns:  (seq_len, batch, d_model) float32
    """
    S, B = src.shape
    D = d_model
    L = len(params["layers"])
    scale = math.sqrt(float(d_model))

    # TODO(synk): nn.Embedding gather kept as an XLA take (data-dependent gather); the scale and
    #             positional-encoding add are fused into the layer-0 step of the Pallas kernel.
    x = params["embedding"][src.T]                       # gather directly into (B, S, D)
    pe = sinusoidal_pe(max_seq_length, D)[:S]            # (S, D)

    # Compact bf16 0/1 mask (no dense f32 bias stream); bias built in-kernel.
    if src_mask is None:
        mask = jnp.ones((B, S, S), jnp.bfloat16)
    else:
        mask = jnp.broadcast_to(src_mask, (B, 1, S, S)).reshape(B, S, S).astype(jnp.bfloat16)

    if L == 0:                                           # degenerate case: no encoder layers
        return jnp.transpose(x * scale + pe[None], (1, 0, 2))

    stacked = prep_stacked_params(params["layers"])
    d_ff = params["layers"][0]["w1"].shape[1]

    # Dropout is identity in eval mode.
    out2 = run_encoder_stack(
        x.reshape(B * S, D), mask, pe, stacked,
        batch=B, seq_len=S, d_model=D, num_heads=num_heads, d_ff=d_ff, embed_scale=scale)

    return jnp.transpose(out2.reshape(B, S, D), (1, 0, 2))   # back to torch (S, B, D)


# -----------------------------------------------------------------------------
if __name__ == "__main__":
    num_layers = 2
    d_model = 128          # lane-dense last dim (multiple of 128)
    num_heads = 4
    d_ff = 256
    input_vocab_size = 100
    max_seq_length = 16
    seq_len = 8
    batch = 2

    key = jax.random.PRNGKey(0)
    pkey, tkey = jax.random.split(key)
    params = init_params(pkey, num_layers, d_model, d_ff, input_vocab_size)

    src = jax.random.randint(tkey, (seq_len, batch), 0, input_vocab_size, dtype=jnp.int32)
    # Full-visibility mask (1 = attend). Arbitrary 0/1 masks also work.
    src_mask = jnp.ones((batch, 1, seq_len, seq_len), jnp.float32)

    out = encoder_forward(
        src, src_mask, params,
        d_model=d_model, num_heads=num_heads, max_seq_length=max_seq_length,
    )
    out = jax.block_until_ready(out)
    assert out.shape == (seq_len, batch, d_model)
    assert bool(jnp.all(jnp.isfinite(out)))
    print("KERNEL_OK")
</pallas_src>

<mosaic_0001>
module attributes {stable_mosaic.version = 11 : i64} {
  func.func @encoder_stack_kernel(%arg0: i32, %arg1: i32, %arg2: memref<8x128xf32, #tpu.memory_space<vmem>>, %arg3: memref<1x8x8xbf16, #tpu.memory_space<vmem>>, %arg4: memref<8x128xf32, #tpu.memory_space<vmem>>, %arg5: memref<1x128x384xbf16, #tpu.memory_space<vmem>>, %arg6: memref<1x1x384xf32, #tpu.memory_space<vmem>>, %arg7: memref<1x128x128xbf16, #tpu.memory_space<vmem>>, %arg8: memref<1x1x128xf32, #tpu.memory_space<vmem>>, %arg9: memref<1x1x128xf32, #tpu.memory_space<vmem>>, %arg10: memref<1x1x128xf32, #tpu.memory_space<vmem>>, %arg11: memref<1x128x256xbf16, #tpu.memory_space<vmem>>, %arg12: memref<1x1x256xf32, #tpu.memory_space<vmem>>, %arg13: memref<1x256x128xbf16, #tpu.memory_space<vmem>>, %arg14: memref<1x1x128xf32, #tpu.memory_space<vmem>>, %arg15: memref<1x1x128xf32, #tpu.memory_space<vmem>>, %arg16: memref<1x1x128xf32, #tpu.memory_space<vmem>>, %arg17: memref<8x128xf32, #tpu.memory_space<vmem>>, %arg18: memref<8x128xf32, #tpu.memory_space<vmem>>) attributes {dimension_semantics = [#tpu.dimension_semantics<parallel>, #tpu.dimension_semantics<arbitrary>], iteration_bounds = array<i64: 2, 2>, scalar_prefetch = 0 : i64, scratch_operands = 1 : i64, tpu.core_type = #tpu.core_type<tc>, window_params = [{transform_indices = @transform_0, window_bounds = array<i64: 8, 128>}, {transform_indices = @transform_1, window_bounds = array<i64: 1, 8, 8>}, {pipeline_mode = #tpu.pipeline_mode<synchronous>, transform_indices = @transform_2, window_bounds = array<i64: 8, 128>}, {transform_indices = @transform_3, window_bounds = array<i64: 1, 128, 384>}, {transform_indices = @transform_4, window_bounds = array<i64: 1, 1, 384>}, {transform_indices = @transform_5, window_bounds = array<i64: 1, 128, 128>}, {transform_indices = @transform_6, window_bounds = array<i64: 1, 1, 128>}, {transform_indices = @transform_7, window_bounds = array<i64: 1, 1, 128>}, {transform_indices = @transform_8, window_bounds = array<i64: 1, 1, 128>}, {transform_indices = @transform_9, window_bounds = array<i64: 1, 128, 256>}, {transform_indices = @transform_10, window_bounds = array<i64: 1, 1, 256>}, {transform_indices = @transform_11, window_bounds = array<i64: 1, 256, 128>}, {transform_indices = @transform_12, window_bounds = array<i64: 1, 1, 128>}, {transform_indices = @transform_13, window_bounds = array<i64: 1, 1, 128>}, {transform_indices = @transform_14, window_bounds = array<i64: 1, 1, 128>}, {transform_indices = @transform_15, window_bounds = array<i64: 8, 128>}]} {
    %c0_i32 = arith.constant 0 : i32
    %0 = arith.cmpi eq, %arg1, %c0_i32 : i32
    %1 = arith.extui %0 : i1 to i32
    %c0_i32_0 = arith.constant 0 : i32
    %2 = arith.cmpi ne, %1, %c0_i32_0 : i32
    scf.if %2 {
      %c0_66 = arith.constant 0 : index
      %c0_67 = arith.constant 0 : index
      %155 = vector.load %arg4[%c0_66, %c0_67] : memref<8x128xf32, #tpu.memory_space<vmem>>, vector<8x128xf32>
      %c0_68 = arith.constant 0 : index
      %c0_69 = arith.constant 0 : index
      %156 = vector.load %arg2[%c0_68, %c0_69] : memref<8x128xf32, #tpu.memory_space<vmem>>, vector<8x128xf32>
      %cst_70 = arith.constant 11.3137083 : f32
      %157 = vector.broadcast %cst_70 : f32 to vector<8x128xf32>
      %158 = arith.mulf %156, %157 : vector<8x128xf32>
      %159 = arith.addf %158, %155 : vector<8x128xf32>
      %c0_71 = arith.constant 0 : index
      %c0_72 = arith.constant 0 : index
      %160 = vector.load %arg18[%c0_71, %c0_72] : memref<8x128xf32, #tpu.memory_space<vmem>>, vector<8x128xf32>
      tpu.vector_store %arg18[%c0_71, %c0_72], %159 {strides = array<i32>} : memref<8x128xf32, #tpu.memory_space<vmem>>, vector<8x128xf32>,
    } else {
    }
    %c0 = arith.constant 0 : index
    %c0_1 = arith.constant 0 : index
    %3 = vector.load %arg18[%c0, %c0_1] : memref<8x128xf32, #tpu.memory_space<vmem>>, vector<8x128xf32>
    %4 = arith.truncf %3 : vector<8x128xf32> to vector<8x128xbf16>
    %c0_2 = arith.constant 0 : index
    %c0_3 = arith.constant 0 : index
    %c0_4 = arith.constant 0 : index
    %5 = vector.load %arg5[%c0_2, %c0_3, %c0_4] : memref<1x128x384xbf16, #tpu.memory_space<vmem>>, vector<1x128x384xbf16>
    %6 = vector.shape_cast %5 : vector<1x128x384xbf16> to vector<128x384xbf16>
    %cst = arith.constant dense<0.000000e+00> : vector<8x384xf32>
    %7 = tpu.matmul %4, %6, %cst {dimension_numbers = #tpu.dot_dimension_numbers<[1], [0], [0], [1], [0, 0, 1, 1], [], []>} : vector<8x128xbf16>, vector<128x384xbf16>, vector<8x384xf32> -> vector<8x384xf32>
    %c0_5 = arith.constant 0 : index
    %c0_6 = arith.constant 0 : index
    %c0_7 = arith.constant 0 : index
    %8 = vector.load %arg6[%c0_5, %c0_6, %c0_7] : memref<1x1x384xf32, #tpu.memory_space<vmem>>, vector<1x1x384xf32>
    %9 = vector.shape_cast %8 : vector<1x1x384xf32> to vector<1x384xf32>
    %10 = vector.broadcast %9 : vector<1x384xf32> to vector<8x384xf32>
    %11 = arith.addf %7, %10 : vector<8x384xf32>
    %12 = arith.truncf %11 : vector<8x384xf32> to vector<8x384xbf16>
    %13 = vector.extract_strided_slice %12 {offsets = [0, 0], sizes = [8, 32], strides = [1, 1]} : vector<8x384xbf16> to vector<8x32xbf16>
    %14 = vector.extract_strided_slice %12 {offsets = [0, 32], sizes = [8, 32], strides = [1, 1]} : vector<8x384xbf16> to vector<8x32xbf16>
    %15 = vector.extract_strided_slice %12 {offsets = [0, 64], sizes = [8, 32], strides = [1, 1]} : vector<8x384xbf16> to vector<8x32xbf16>
    %16 = vector.extract_strided_slice %12 {offsets = [0, 96], sizes = [8, 32], strides = [1, 1]} : vector<8x384xbf16> to vector<8x32xbf16>
    %17 = vector.shape_cast %13 : vector<8x32xbf16> to vector<1x8x32xbf16>
    %18 = vector.shape_cast %14 : vector<8x32xbf16> to vector<1x8x32xbf16>
    %19 = vector.shape_cast %15 : vector<8x32xbf16> to vector<1x8x32xbf16>
    %20 = vector.shape_cast %16 : vector<8x32xbf16> to vector<1x8x32xbf16>
    %21 = tpu.concatenate %17, %18, %19, %20 in 0 : vector<1x8x32xbf16>, vector<1x8x32xbf16>, vector<1x8x32xbf16>, vector<1x8x32xbf16> -> vector<4x8x32xbf16>
    %22 = vector.extract_strided_slice %12 {offsets = [0, 128], sizes = [8, 32], strides = [1, 1]} : vector<8x384xbf16> to vector<8x32xbf16>
    %23 = vector.extract_strided_slice %12 {offsets = [0, 160], sizes = [8, 32], strides = [1, 1]} : vector<8x384xbf16> to vector<8x32xbf16>
    %24 = vector.extract_strided_slice %12 {offsets = [0, 192], sizes = [8, 32], strides = [1, 1]} : vector<8x384xbf16> to vector<8x32xbf16>
    %25 = vector.extract_strided_slice %12 {offsets = [0, 224], sizes = [8, 32], strides = [1, 1]} : vector<8x384xbf16> to vector<8x32xbf16>
    %26 = vector.shape_cast %22 : vector<8x32xbf16> to vector<1x8x32xbf16>
    %27 = vector.shape_cast %23 : vector<8x32xbf16> to vector<1x8x32xbf16>
    %28 = vector.shape_cast %24 : vector<8x32xbf16> to vector<1x8x32xbf16>
    %29 = vector.shape_cast %25 : vector<8x32xbf16> to vector<1x8x32xbf16>
    %30 = tpu.concatenate %26, %27, %28, %29 in 0 : vector<1x8x32xbf16>, vector<1x8x32xbf16>, vector<1x8x32xbf16>, vector<1x8x32xbf16> -> vector<4x8x32xbf16>
    %31 = vector.extract_strided_slice %12 {offsets = [0, 256], sizes = [8, 32], strides = [1, 1]} : vector<8x384xbf16> to vector<8x32xbf16>
    %32 = vector.extract_strided_slice %12 {offsets = [0, 288], sizes = [8, 32], strides = [1, 1]} : vector<8x384xbf16> to vector<8x32xbf16>
    %33 = vector.extract_strided_slice %12 {offsets = [0, 320], sizes = [8, 32], strides = [1, 1]} : vector<8x384xbf16> to vector<8x32xbf16>
    %34 = vector.extract_strided_slice %12 {offsets = [0, 352], sizes = [8, 32], strides = [1, 1]} : vector<8x384xbf16> to vector<8x32xbf16>
    %35 = vector.shape_cast %31 : vector<8x32xbf16> to vector<1x8x32xbf16>
    %36 = vector.shape_cast %32 : vector<8x32xbf16> to vector<1x8x32xbf16>
    %37 = vector.shape_cast %33 : vector<8x32xbf16> to vector<1x8x32xbf16>
    %38 = vector.shape_cast %34 : vector<8x32xbf16> to vector<1x8x32xbf16>
    %39 = tpu.concatenate %35, %36, %37, %38 in 0 : vector<1x8x32xbf16>, vector<1x8x32xbf16>, vector<1x8x32xbf16>, vector<1x8x32xbf16> -> vector<4x8x32xbf16>
    %c0_8 = arith.constant 0 : index
    %c0_9 = arith.constant 0 : index
    %c0_10 = arith.constant 0 : index
    %40 = vector.load %arg3[%c0_8, %c0_9, %c0_10] : memref<1x8x8xbf16, #tpu.memory_space<vmem>>, vector<1x8x8xbf16>
    %cst_11 = arith.constant 0.000000e+00 : bf16
    %41 = vector.broadcast %cst_11 : bf16 to vector<1x8x8xbf16>
    %42 = arith.cmpf oeq, %40, %41 : vector<1x8x8xbf16>
    %cst_12 = arith.constant -1.000000e+09 : f32
    %cst_13 = arith.constant 0.000000e+00 : f32
    %43 = vector.broadcast %cst_12 : f32 to vector<1x8x8xf32>
    %44 = vector.broadcast %cst_13 : f32 to vector<1x8x8xf32>
    %45 = arith.select %42, %43, %44 : vector<1x8x8xi1>, vector<1x8x8xf32>
    %46 = vector.shape_cast %45 : vector<1x8x8xf32> to vector<1x1x8x8xf32>
    %47 = vector.shape_cast %46 : vector<1x1x8x8xf32> to vector<1x1x8x8xf32>
    %48 = vector.broadcast %47 : vector<1x1x8x8xf32> to vector<4x1x8x8xf32>
    %49 = vector.shape_cast %48 : vector<4x1x8x8xf32> to vector<4x8x8xf32>
    "tpu.trace_start"() <{level = 10 : i32, message = "gqe,gke->gqk"}> : () -> ()
    %cst_14 = arith.constant dense<0.000000e+00> : vector<4x8x8xf32>
    %50 = tpu.matmul %21, %30, %cst_14 {dimension_numbers = #tpu.dot_dimension_numbers<[2], [2], [1], [1], [0, 0, 0, 1, 1, 1], [0], [0]>} : vector<4x8x32xbf16>, vector<4x8x32xbf16>, vector<4x8x8xf32> -> vector<4x8x8xf32>
    "tpu.trace_stop"() : () -> ()
    %cst_15 = arith.constant 0.176776692 : f32
    %51 = vector.broadcast %cst_15 : f32 to vector<4x8x8xf32>
    %52 = arith.mulf %50, %51 : vector<4x8x8xf32>
    %53 = arith.addf %52, %49 : vector<4x8x8xf32>
    %cst_16 = arith.constant dense<0xFF800000> : vector<4x8xf32>
    %54 = vector.multi_reduction <maximumf>, %53, %cst_16 [2] : vector<4x8x8xf32> to vector<4x8xf32>
    %55 = vector.shape_cast %54 : vector<4x8xf32> to vector<4x8x1xf32>
    %56 = vector.broadcast %55 : vector<4x8x1xf32> to vector<4x8x8xf32>
    %57 = arith.subf %53, %56 : vector<4x8x8xf32>
    %58 = math.exp %57 : vector<4x8x8xf32>
    %cst_17 = arith.constant dense<0.000000e+00> : vector<4x8xf32>
    %59 = vector.multi_reduction <add>, %58, %cst_17 [2] : vector<4x8x8xf32> to vector<4x8xf32>
    %60 = vector.shape_cast %59 : vector<4x8xf32> to vector<4x8x1xf32>
    %61 = tpu.reciprocal %60 {approx = true} : vector<4x8x1xf32> -> vector<4x8x1xf32>
    %62 = vector.broadcast %61 : vector<4x8x1xf32> to vector<4x8x8xf32>
    %63 = arith.mulf %58, %62 : vector<4x8x8xf32>
    %64 = arith.truncf %63 : vector<4x8x8xf32> to vector<4x8x8xbf16>
    "tpu.trace_start"() <{level = 10 : i32, message = "gqk,gke->gqe"}> : () -> ()
    %cst_18 = arith.constant dense<0.000000e+00> : vector<4x8x32xf32>
    %65 = tpu.matmul %64, %39, %cst_18 {dimension_numbers = #tpu.dot_dimension_numbers<[2], [1], [1], [2], [0, 0, 0, 1, 1, 2], [0], [0]>} : vector<4x8x8xbf16>, vector<4x8x32xbf16>, vector<4x8x32xf32> -> vector<4x8x32xf32>
    "tpu.trace_stop"() : () -> ()
    %66 = arith.truncf %65 : vector<4x8x32xf32> to vector<4x8x32xbf16>
    %67 = vector.extract_strided_slice %66 {offsets = [0, 0, 0], sizes = [1, 8, 32], strides = [1, 1, 1]} : vector<4x8x32xbf16> to vector<1x8x32xbf16>
    %68 = vector.shape_cast %67 : vector<1x8x32xbf16> to vector<8x32xbf16>
    %69 = vector.extract_strided_slice %66 {offsets = [1, 0, 0], sizes = [1, 8, 32], strides = [1, 1, 1]} : vector<4x8x32xbf16> to vector<1x8x32xbf16>
    %70 = vector.shape_cast %69 : vector<1x8x32xbf16> to vector<8x32xbf16>
    %71 = vector.extract_strided_slice %66 {offsets = [2, 0, 0], sizes = [1, 8, 32], strides = [1, 1, 1]} : vector<4x8x32xbf16> to vector<1x8x32xbf16>
    %72 = vector.shape_cast %71 : vector<1x8x32xbf16> to vector<8x32xbf16>
    %73 = vector.extract_strided_slice %66 {offsets = [3, 0, 0], sizes = [1, 8, 32], strides = [1, 1, 1]} : vector<4x8x32xbf16> to vector<1x8x32xbf16>
    %74 = vector.shape_cast %73 : vector<1x8x32xbf16> to vector<8x32xbf16>
    %75 = tpu.concatenate %68, %70, %72, %74 in 1 : vector<8x32xbf16>, vector<8x32xbf16>, vector<8x32xbf16>, vector<8x32xbf16> -> vector<8x128xbf16>
    %c0_19 = arith.constant 0 : index
    %c0_20 = arith.constant 0 : index
    %c0_21 = arith.constant 0 : index
    %76 = vector.load %arg7[%c0_19, %c0_20, %c0_21] : memref<1x128x128xbf16, #tpu.memory_space<vmem>>, vector<1x128x128xbf16>
    %77 = vector.shape_cast %76 : vector<1x128x128xbf16> to vector<128x128xbf16>
    %cst_22 = arith.constant dense<0.000000e+00> : vector<8x128xf32>
    %78 = tpu.matmul %75, %77, %cst_22 {dimension_numbers = #tpu.dot_dimension_numbers<[1], [0], [0], [1], [0, 0, 1, 1], [], []>} : vector<8x128xbf16>, vector<128x128xbf16>, vector<8x128xf32> -> vector<8x128xf32>
    %c0_23 = arith.constant 0 : index
    %c0_24 = arith.constant 0 : index
    %c0_25 = arith.constant 0 : index
    %79 = vector.load %arg8[%c0_23, %c0_24, %c0_25] : memref<1x1x128xf32, #tpu.memory_space<vmem>>, vector<1x1x128xf32>
    %80 = vector.shape_cast %79 : vector<1x1x128xf32> to vector<1x128xf32>
    %81 = vector.broadcast %80 : vector<1x128xf32> to vector<8x128xf32>
    %82 = arith.addf %78, %81 : vector<8x128xf32>
    %83 = arith.addf %3, %82 : vector<8x128xf32>
    %c0_26 = arith.constant 0 : index
    %c0_27 = arith.constant 0 : index
    %c0_28 = arith.constant 0 : index
    %84 = vector.load %arg9[%c0_26, %c0_27, %c0_28] : memref<1x1x128xf32, #tpu.memory_space<vmem>>, vector<1x1x128xf32>
    %85 = vector.shape_cast %84 : vector<1x1x128xf32> to vector<1x128xf32>
    %c0_29 = arith.constant 0 : index
    %c0_30 = arith.constant 0 : index
    %c0_31 = arith.constant 0 : index
    %86 = vector.load %arg10[%c0_29, %c0_30, %c0_31] : memref<1x1x128xf32, #tpu.memory_space<vmem>>, vector<1x1x128xf32>
    %87 = vector.shape_cast %86 : vector<1x1x128xf32> to vector<1x128xf32>
    %cst_32 = arith.constant dense<0.000000e+00> : vector<8xf32>
    %88 = vector.multi_reduction <add>, %83, %cst_32 [1] : vector<8x128xf32> to vector<8xf32>
    %89 = vector.shape_cast %88 : vector<8xf32> to vector<8x1xf32>
    %cst_33 = arith.constant 1.280000e+02 : f32
    %90 = vector.broadcast %cst_33 : f32 to vector<8x1xf32>
    %91 = arith.divf %89, %90 : vector<8x1xf32>
    %92 = vector.broadcast %91 : vector<8x1xf32> to vector<8x128xf32>
    %93 = arith.subf %83, %92 : vector<8x128xf32>
    %94 = arith.mulf %93, %93 : vector<8x128xf32>
    %cst_34 = arith.constant dense<0.000000e+00> : vector<8xf32>
    %95 = vector.multi_reduction <add>, %94, %cst_34 [1] : vector<8x128xf32> to vector<8xf32>
    %96 = vector.shape_cast %95 : vector<8xf32> to vector<8x1xf32>
    %cst_35 = arith.constant 1.280000e+02 : f32
    %97 = vector.broadcast %cst_35 : f32 to vector<8x1xf32>
    %98 = arith.divf %96, %97 : vector<8x1xf32>
    %cst_36 = arith.constant 9.99999974E-6 : f32
    %99 = vector.broadcast %cst_36 : f32 to vector<8x1xf32>
    %100 = arith.addf %98, %99 : vector<8x1xf32>
    %101 = math.rsqrt %100 : vector<8x1xf32>
    %102 = vector.broadcast %101 : vector<8x1xf32> to vector<8x128xf32>
    %103 = arith.mulf %93, %102 : vector<8x128xf32>
    %104 = vector.broadcast %85 : vector<1x128xf32> to vector<8x128xf32>
    %105 = arith.mulf %103, %104 : vector<8x128xf32>
    %106 = vector.broadcast %87 : vector<1x128xf32> to vector<8x128xf32>
    %107 = arith.addf %105, %106 : vector<8x128xf32>
    %108 = arith.truncf %107 : vector<8x128xf32> to vector<8x128xbf16>
    %c0_37 = arith.constant 0 : index
    %c0_38 = arith.constant 0 : index
    %c0_39 = arith.constant 0 : index
    %109 = vector.load %arg11[%c0_37, %c0_38, %c0_39] : memref<1x128x256xbf16, #tpu.memory_space<vmem>>, vector<1x128x256xbf16>
    %110 = vector.shape_cast %109 : vector<1x128x256xbf16> to vector<128x256xbf16>
    %cst_40 = arith.constant dense<0.000000e+00> : vector<8x256xf32>
    %111 = tpu.matmul %108, %110, %cst_40 {dimension_numbers = #tpu.dot_dimension_numbers<[1], [0], [0], [1], [0, 0, 1, 1], [], []>} : vector<8x128xbf16>, vector<128x256xbf16>, vector<8x256xf32> -> vector<8x256xf32>
    %c0_41 = arith.constant 0 : index
    %c0_42 = arith.constant 0 : index
    %c0_43 = arith.constant 0 : index
    %112 = vector.load %arg12[%c0_41, %c0_42, %c0_43] : memref<1x1x256xf32, #tpu.memory_space<vmem>>, vector<1x1x256xf32>
    %113 = vector.shape_cast %112 : vector<1x1x256xf32> to vector<1x256xf32>
    %114 = vector.broadcast %113 : vector<1x256xf32> to vector<8x256xf32>
    %115 = arith.addf %111, %114 : vector<8x256xf32>
    %cst_44 = arith.constant 0.000000e+00 : f32
    %116 = vector.broadcast %cst_44 : f32 to vector<8x256xf32>
    %117 = arith.maximumf %115, %116 : vector<8x256xf32>
    %118 = arith.truncf %117 : vector<8x256xf32> to vector<8x256xbf16>
    %c0_45 = arith.constant 0 : index
    %c0_46 = arith.constant 0 : index
    %c0_47 = arith.constant 0 : index
    %119 = vector.load %arg13[%c0_45, %c0_46, %c0_47] : memref<1x256x128xbf16, #tpu.memory_space<vmem>>, vector<1x256x128xbf16>
    %120 = vector.shape_cast %119 : vector<1x256x128xbf16> to vector<256x128xbf16>
    %cst_48 = arith.constant dense<0.000000e+00> : vector<8x128xf32>
    %121 = tpu.matmul %118, %120, %cst_48 {dimension_numbers = #tpu.dot_dimension_numbers<[1], [0], [0], [1], [0, 0, 1, 1], [], []>} : vector<8x256xbf16>, vector<256x128xbf16>, vector<8x128xf32> -> vector<8x128xf32>
    %c0_49 = arith.constant 0 : index
    %c0_50 = arith.constant 0 : index
    %c0_51 = arith.constant 0 : index
    %122 = vector.load %arg14[%c0_49, %c0_50, %c0_51] : memref<1x1x128xf32, #tpu.memory_space<vmem>>, vector<1x1x128xf32>
    %123 = vector.shape_cast %122 : vector<1x1x128xf32> to vector<1x128xf32>
    %124 = vector.broadcast %123 : vector<1x128xf32> to vector<8x128xf32>
    %125 = arith.addf %121, %124 : vector<8x128xf32>
    %126 = arith.addf %107, %125 : vector<8x128xf32>
    %c0_52 = arith.constant 0 : index
    %c0_53 = arith.constant 0 : index
    %c0_54 = arith.constant 0 : index
    %127 = vector.load %arg15[%c0_52, %c0_53, %c0_54] : memref<1x1x128xf32, #tpu.memory_space<vmem>>, vector<1x1x128xf32>
    %128 = vector.shape_cast %127 : vector<1x1x128xf32> to vector<1x128xf32>
    %c0_55 = arith.constant 0 : index
    %c0_56 = arith.constant 0 : index
    %c0_57 = arith.constant 0 : index
    %129 = vector.load %arg16[%c0_55, %c0_56, %c0_57] : memref<1x1x128xf32, #tpu.memory_space<vmem>>, vector<1x1x128xf32>
    %130 = vector.shape_cast %129 : vector<1x1x128xf32> to vector<1x128xf32>
    %cst_58 = arith.constant dense<0.000000e+00> : vector<8xf32>
    %131 = vector.multi_reduction <add>, %126, %cst_58 [1] : vector<8x128xf32> to vector<8xf32>
    %132 = vector.shape_cast %131 : vector<8xf32> to vector<8x1xf32>
    %cst_59 = arith.constant 1.280000e+02 : f32
    %133 = vector.broadcast %cst_59 : f32 to vector<8x1xf32>
    %134 = arith.divf %132, %133 : vector<8x1xf32>
    %135 = vector.broadcast %134 : vector<8x1xf32> to vector<8x128xf32>
    %136 = arith.subf %126, %135 : vector<8x128xf32>
    %137 = arith.mulf %136, %136 : vector<8x128xf32>
    %cst_60 = arith.constant dense<0.000000e+00> : vector<8xf32>
    %138 = vector.multi_reduction <add>, %137, %cst_60 [1] : vector<8x128xf32> to vector<8xf32>
    %139 = vector.shape_cast %138 : vector<8xf32> to vector<8x1xf32>
    %cst_61 = arith.constant 1.280000e+02 : f32
    %140 = vector.broadcast %cst_61 : f32 to vector<8x1xf32>
    %141 = arith.divf %139, %140 : vector<8x1xf32>
    %cst_62 = arith.constant 9.99999974E-6 : f32
    %142 = vector.broadcast %cst_62 : f32 to vector<8x1xf32>
    %143 = arith.addf %141, %142 : vector<8x1xf32>
    %144 = math.rsqrt %143 : vector<8x1xf32>
    %145 = vector.broadcast %144 : vector<8x1xf32> to vector<8x128xf32>
    %146 = arith.mulf %136, %145 : vector<8x128xf32>
    %147 = vector.broadcast %128 : vector<1x128xf32> to vector<8x128xf32>
    %148 = arith.mulf %146, %147 : vector<8x128xf32>
    %149 = vector.broadcast %130 : vector<1x128xf32> to vector<8x128xf32>
    %150 = arith.addf %148, %149 : vector<8x128xf32>
    %c0_63 = arith.constant 0 : index
    %c0_64 = arith.constant 0 : index
    %151 = vector.load %arg18[%c0_63, %c0_64] : memref<8x128xf32, #tpu.memory_space<vmem>>, vector<8x128xf32>
    tpu.vector_store %arg18[%c0_63, %c0_64], %150 {strides = array<i32>} : memref<8x128xf32, #tpu.memory_space<vmem>>, vector<8x128xf32>,
    %c1_i32 = arith.constant 1 : i32
    %152 = arith.cmpi eq, %arg1, %c1_i32 : i32
    %153 = arith.extui %152 : i1 to i32
    %c0_i32_65 = arith.constant 0 : i32
    %154 = arith.cmpi ne, %153, %c0_i32_65 : i32
    scf.if %154 {
      %c0_66 = arith.constant 0 : index
      %c0_67 = arith.constant 0 : index
      %155 = vector.load %arg17[%c0_66, %c0_67] : memref<8x128xf32, #tpu.memory_space<vmem>>, vector<8x128xf32>
      tpu.vector_store %arg17[%c0_66, %c0_67], %150 {strides = array<i32>} : memref<8x128xf32, #tpu.memory_space<vmem>>, vector<8x128xf32>,
    } else {
    }
    return
  }
  func.func @transform_0(%arg0: i32, %arg1: i32) -> (i32, i32) {
    %c0_i32 = arith.constant 0 : i32
    %c0_i32_0 = arith.constant 0 : i32
    return %arg0, %c0_i32 : i32, i32
  }
  func.func @transform_1(%arg0: i32, %arg1: i32) -> (i32, i32, i32) {
    %c0_i32 = arith.constant 0 : i32
    %c0_i32_0 = arith.constant 0 : i32
    %c0_i32_1 = arith.constant 0 : i32
    return %arg0, %c0_i32, %c0_i32_0 : i32, i32, i32
  }
  func.func @transform_2(%arg0: i32, %arg1: i32) -> (i32, i32) {
    %c0_i32 = arith.constant 0 : i32
    %c0_i32_0 = arith.constant 0 : i32
    %c0_i32_1 = arith.constant 0 : i32
    return %c0_i32, %c0_i32_0 : i32, i32
  }
  func.func @transform_3(%arg0: i32, %arg1: i32) -> (i32, i32, i32) {
    %c0_i32 = arith.constant 0 : i32
    %c0_i32_0 = arith.constant 0 : i32
    %c0_i32_1 = arith.constant 0 : i32
    return %arg1, %c0_i32, %c0_i32_0 : i32, i32, i32
  }
  func.func @transform_4(%arg0: i32, %arg1: i32) -> (i32, i32, i32) {
    %c0_i32 = arith.constant 0 : i32
    %c0_i32_0 = arith.constant 0 : i32
    %c0_i32_1 = arith.constant 0 : i32
    return %arg1, %c0_i32, %c0_i32_0 : i32, i32, i32
  }
  func.func @transform_5(%arg0: i32, %arg1: i32) -> (i32, i32, i32) {
    %c0_i32 = arith.constant 0 : i32
    %c0_i32_0 = arith.constant 0 : i32
    %c0_i32_1 = arith.constant 0 : i32
    return %arg1, %c0_i32, %c0_i32_0 : i32, i32, i32
  }
  func.func @transform_6(%arg0: i32, %arg1: i32) -> (i32, i32, i32) {
    %c0_i32 = arith.constant 0 : i32
    %c0_i32_0 = arith.constant 0 : i32
    %c0_i32_1 = arith.constant 0 : i32
    return %arg1, %c0_i32, %c0_i32_0 : i32, i32, i32
  }
  func.func @transform_7(%arg0: i32, %arg1: i32) -> (i32, i32, i32) {
    %c0_i32 = arith.constant 0 : i32
    %c0_i32_0 = arith.constant 0 : i32
    %c0_i32_1 = arith.constant 0 : i32
    return %arg1, %c0_i32, %c0_i32_0 : i32, i32, i32
  }
  func.func @transform_8(%arg0: i32, %arg1: i32) -> (i32, i32, i32) {
    %c0_i32 = arith.constant 0 : i32
    %c0_i32_0 = arith.constant 0 : i32
    %c0_i32_1 = arith.constant 0 : i32
    return %arg1, %c0_i32, %c0_i32_0 : i32, i32, i32
  }
  func.func @transform_9(%arg0: i32, %arg1: i32) -> (i32, i32, i32) {
    %c0_i32 = arith.constant 0 : i32
    %c0_i32_0 = arith.constant 0 : i32
    %c0_i32_1 = arith.constant 0 : i32
    return %arg1, %c0_i32, %c0_i32_0 : i32, i32, i32
  }
  func.func @transform_10(%arg0: i32, %arg1: i32) -> (i32, i32, i32) {
    %c0_i32 = arith.constant 0 : i32
    %c0_i32_0 = arith.constant 0 : i32
    %c0_i32_1 = arith.constant 0 : i32
    return %arg1, %c0_i32, %c0_i32_0 : i32, i32, i32
  }
  func.func @transform_11(%arg0: i32, %arg1: i32) -> (i32, i32, i32) {
    %c0_i32 = arith.constant 0 : i32
    %c0_i32_0 = arith.constant 0 : i32
    %c0_i32_1 = arith.constant 0 : i32
    return %arg1, %c0_i32, %c0_i32_0 : i32, i32, i32
  }
  func.func @transform_12(%arg0: i32, %arg1: i32) -> (i32, i32, i32) {
    %c0_i32 = arith.constant 0 : i32
    %c0_i32_0 = arith.constant 0 : i32
    %c0_i32_1 = arith.constant 0 : i32
    return %arg1, %c0_i32, %c0_i32_0 : i32, i32, i32
  }
  func.func @transform_13(%arg0: i32, %arg1: i32) -> (i32, i32, i32) {
    %c0_i32 = arith.constant 0 : i32
    %c0_i32_0 = arith.constant 0 : i32
    %c0_i32_1 = arith.constant 0 : i32
    return %arg1, %c0_i32, %c0_i32_0 : i32, i32, i32
  }
  func.func @transform_14(%arg0: i32, %arg1: i32) -> (i32, i32, i32) {
    %c0_i32 = arith.constant 0 : i32
    %c0_i32_0 = arith.constant 0 : i32
    %c0_i32_1 = arith.constant 0 : i32
    return %arg1, %c0_i32, %c0_i32_0 : i32, i32, i32
  }
  func.func @transform_15(%arg0: i32, %arg1: i32) -> (i32, i32) {
    %c0_i32 = arith.constant 0 : i32
    %c0_i32_0 = arith.constant 0 : i32
    return %arg0, %c0_i32 : i32, i32
  }
}

</mosaic_0001>

<llo_original>
// kernel: tpu_custom_call.1
$region0: #{tpu_custom_call.1}
  #allocation0 [shape = 'u32[]', space=smem, size = 0x4, offset = 0x4, fixed_abs, tag = 'smem constant byte address 0x4 - core index']
  #allocation1 [shape = 'u32[72,128]{1,0:T(1,128)}', space=vmem, size = 0x9000, scoped, tag = 'internal scratch']
  #allocation2 [shape = 'f32[8,128]{1,0:T(8,128)}', space=vmem, size = 0x1000, scoped, tag = 'scratch operand']
  %s0 = inlined_call_operand.hbm [shape: f32[16,128], index: 0, kind: input, shape index: {}]
  %s1 = inlined_call_operand.hbm [shape: bf16[2,8,8], index: 1, kind: input, shape index: {}]
  %s2 = inlined_call_operand.hbm [shape: f32[8,128], index: 2, kind: input, shape index: {}]
  %s3 = inlined_call_operand.hbm [shape: bf16[2,128,384], index: 3, kind: input, shape index: {}]
  %s4 = inlined_call_operand.hbm [shape: f32[2,1,384], index: 4, kind: input, shape index: {}]
  %s5 = inlined_call_operand.hbm [shape: bf16[2,128,128], index: 5, kind: input, shape index: {}]
  %s6 = inlined_call_operand.vmem [shape: f32[2,1,128], index: 6, kind: input, shape index: {}]
  %s7 = inlined_call_operand.hbm [shape: f32[2,1,128], index: 7, kind: input, shape index: {}]
  %s8 = inlined_call_operand.hbm [shape: f32[2,1,128], index: 8, kind: input, shape index: {}]
  %s9 = inlined_call_operand.hbm [shape: bf16[2,128,256], index: 9, kind: input, shape index: {}]
  %s10 = inlined_call_operand.vmem [shape: f32[2,1,256], index: 10, kind: input, shape index: {}]
  %s11 = inlined_call_operand.hbm [shape: bf16[2,256,128], index: 11, kind: input, shape index: {}]
  %s12 = inlined_call_operand.vmem [shape: f32[2,1,128], index: 12, kind: input, shape index: {}]
  %s13 = inlined_call_operand.vmem [shape: f32[2,1,128], index: 13, kind: input, shape index: {}]
  %s14 = inlined_call_operand.vmem [shape: f32[2,1,128], index: 14, kind: input, shape index: {}]
  %s15 = inlined_call_operand.hbm [shape: f32[16,128], index: 15, kind: output, shape index: {}]
  %s16 = sld [smem:[#allocation0]]
  $region141: #{tpu_custom_call.1} parent=0
    _
  %s18 = ssub.s32 1, %s16
  %s19 = scalar_select 0, %s18, %s16
  $region1: #{tpu_custom_call.1} parent=0
    #allocation3 [shape = 'u8[8192]{0}', space=vmem, size = 0x2000, scoped, tag = 'input window, operand 0']
    #allocation4 [shape = 's32[2]{0}', space=sflag, size = 0x8, scoped, tag = 'scoped memory for tpu_custom_call.1']
    #allocation5 [shape = 's32[2]{0}', space=sflag, size = 0x8, scoped, tag = 'scoped memory for tpu_custom_call.1']
    #allocation6 [shape = 'u8[4096]{0}', space=vmem, size = 0x1000, scoped, tag = 'input window, operand 1']
    #allocation7 [shape = 's32[2]{0}', space=sflag, size = 0x8, scoped, tag = 'scoped memory for tpu_custom_call.1']
    #allocation8 [shape = 'u8[4096]{0}', space=vmem, size = 0x1000, scoped, tag = 'input window, operand 2, single buffered']
    #allocation9 [shape = 'u8[196608]{0}', space=vmem, size = 0x30000, scoped, tag = 'input window, operand 3']
    #allocation10 [shape = 's32[2]{0}', space=sflag, size = 0x8, scoped, tag = 'scoped memory for tpu_custom_call.1']
    #allocation11 [shape = 'u8[3072]{0}', space=vmem, size = 0xc00, scoped, tag = 'input window, operand 4']
    #allocation12 [shape = 'u8[65536]{0}', space=vmem, size = 0x10000, scoped, tag = 'input window, operand 5']
    #allocation13 [shape = 's32[2]{0}', space=sflag, size = 0x8, scoped, tag = 'scoped memory for tpu_custom_call.1']
    #allocation14 [shape = 'u8[1024]{0}', space=vmem, size = 0x400, scoped, tag = 'input window, operand 7']
    #allocation15 [shape = 'u8[1024]{0}', space=vmem, size = 0x400, scoped, tag = 'input window, operand 8']
    #allocation16 [shape = 's32[2]{0}', space=sflag, size = 0x8, scoped, tag = 'scoped memory for tpu_custom_call.1']
    #allocation17 [shape = 'u8[131072]{0}', space=vmem, size = 0x20000, scoped, tag = 'input window, operand 9']
    #allocation18 [shape = 'u8[131072]{0}', space=vmem, size = 0x20000, scoped, tag = 'input window, operand 11']
    #allocation19 [shape = 's32[2]{0}', space=sflag, size = 0x8, scoped, tag = 'scoped memory for tpu_custom_call.1']
    #allocation20 [shape = 'u8[8192]{0}', space=vmem, size = 0x2000, scoped, tag = 'output window, operand 0']
    %20 = vsyncpa [#allocation4], 0
    %s21 = scalar_lea.sflag [#allocation4], 1
    %22 = vsyncpa %s21, 0
    %23 = vsyncpa [#allocation7], 0
    %s24 = scalar_lea.sflag [#allocation7], 1
    %25 = vsyncpa %s24, 0
    %26 = vsyncpa [#allocation10], 0
    %s27 = scalar_lea.sflag [#allocation10], 1
    %28 = vsyncpa %s27, 0
    %29 = vsyncpa [#allocation13], 0
    %s30 = scalar_lea.sflag [#allocation13], 1
    %31 = vsyncpa %s30, 0
    %32 = vsyncpa [#allocation16], 0
    %s33 = scalar_lea.sflag [#allocation16], 1
    %34 = vsyncpa %s33, 0
    %35 = vsyncpa [#allocation19], 0
    %s36 = scalar_lea.sflag [#allocation19], 1
    %37 = vsyncpa %s36, 0
    %38 = vsyncpa [#allocation5], 0
    %s39 = scalar_lea.sflag [#allocation5], 1
    %40 = vsyncpa %s39, 0
    loop: start=0, step=1, limit=6
    $region2: #{tpu_custom_call.1} parent=1 // loop_pre_header
      _
    $region3: #{tpu_custom_call.1} parent=1 // loop_header
      %s42 = sphi 0, %s46
      %p43 = scmp.ge.s32.totalorder %s42, 6
      %s49 = sphi 0, %s61
      %s50 = sphi 0, %s57
      %s51 = sphi 0, %s49
      %s52 = sphi 0, %s50
      %s53 = sphi 0, %s51
      %s54 = sphi 0, %s52
      %s64 = sphi 0, %s66
      %s67 = sphi 0, %s64
      %s68 = sphi 0, %s67
      %s84 = sphi 0, %s68
      %s90 = sphi 0, %s92
      %s93 = sphi 0, %s90
      %s94 = sphi 0, %s93
      %s110 = sphi 0, %s94
      %s114 = sphi 0, %s114
      %s116 = sphi 0, %s114
      %s117 = sphi 0, %s116
      %s131 = sphi 0, %s117
      %s137 = sphi 0, %s139
      %s140 = sphi 0, %s137
      %s141 = sphi 0, %s140
      %s157 = sphi 0, %s141
      %s163 = sphi 0, %s165
      %s166 = sphi 0, %s163
      %s167 = sphi 0, %s166
      %s183 = sphi 0, %s167
      %s189 = sphi 0, %s191
      %s192 = sphi 0, %s189
      %s193 = sphi 0, %s192
      %s209 = sphi 0, %s193
      %s215 = sphi 0, %s217
      %s218 = sphi 0, %s215
      %s219 = sphi 0, %s218
      %s235 = sphi 0, %s219
      %s241 = sphi 0, %s243
      %s244 = sphi 0, %s241
      %s245 = sphi 0, %s244
      %s261 = sphi 0, %s245
      %s267 = sphi 0, %s269
      %s270 = sphi 0, %s267
      %s271 = sphi 0, %s270
      %s287 = sphi 0, %s271
      %s293 = sphi 0, %s295
      %s296 = sphi 0, %s293
      %s297 = sphi 0, %s296
      %s313 = sphi 0, %s297
      %s319 = sphi 0, %s321
      %s322 = sphi 0, %s319
      %s323 = sphi 0, %s322
      %s339 = sphi 0, %s323
      %s345 = sphi 0, %s347
      %s348 = sphi 0, %s345
      %s349 = sphi 0, %s348
      %s365 = sphi 0, %s349
      %s371 = sphi 0, %s373
      %s374 = sphi 0, %s371
      %s375 = sphi 0, %s374
      %s391 = sphi 0, %s375
      %s397 = sphi 0, %s399
      %s400 = sphi 0, %s397
      %s401 = sphi 0, %s400
      %s417 = sphi 0, %s401
      %s423 = sphi 0, %s425
      %s426 = sphi 0, %s423
      %s427 = sphi 0, %s426
      %s443 = sphi 0, %s427
      %s449 = sphi 0, %s451
      %s452 = sphi 0, %s449
      %s453 = sphi 0, %s452
      %s469 = sphi 0, %s453
    $region4: #{tpu_custom_call.1} parent=1 // loop_header_branch
      %45 = sbr.rel (%p43) target = $region8
    $region5: #{tpu_custom_call.1} parent=1 // loop_body
      %s47 = ssub.s32 %s42, 1
      %s48 = ssub.s32 %s42, 2
      %s55 = sadd.s32 1, %s50
      %p56 = scmp.ge.s32.totalorder %s55, 2
      %s57 = scalar_select %p56, 0, %s55
      %s58 = sadd.s32 1, %s49
      %s59 = scalar_select %p56, %s58, %s49
      %p60 = scmp.ge.s32.totalorder %s59, 2
      %s61 = scalar_select %p60, 0, %s59
      %s62 = ssub.s32 %s49, %s61
      %p63 = scmp.eq.s32.totalorder %s62, 0
      %s65 = sadd.s32 %s64, 1
      %s66 = scalar_select %p63, %s64, %s65
      %p69 = pneg %p63
      %p70 = scmp.eq.s32.totalorder %s42, 3
      %p71 = por %p69, %p70
      %p72 = scmp.ne.s32.totalorder %s64, %s67
      %p73 = scmp.eq.s32.totalorder %s42, 0
      %p74 = por %p72, %p73
      %p75 = scmp.ne.s32.totalorder %s64, %s67
      %p76 = scmp.eq.s32.totalorder %s47, 3
      %p77 = por %p75, %p76
      %p78 = scmp.ne.s32.totalorder %s67, %s68
      %p79 = scmp.eq.s32.totalorder %s47, 0
      %p80 = por %p78, %p79
      %p81 = scmp.ne.s32.totalorder %s67, %s68
      %p82 = scmp.eq.s32.totalorder %s48, 3
      %p83 = por %p81, %p82
      %p85 = scmp.ne.s32.totalorder %s68, %s84
      %p86 = scmp.eq.s32.totalorder %s48, 0
      %p87 = por %p85, %p86
      %s88 = ssub.s32 %s49, %s61
      %p89 = scmp.eq.s32.totalorder %s88, 0
      %s91 = sadd.s32 %s90, 1
      %s92 = scalar_select %p89, %s90, %s91
      %p95 = pneg %p89
      %p96 = scmp.eq.s32.totalorder %s42, 3
      %p97 = por %p95, %p96
      %p98 = scmp.ne.s32.totalorder %s90, %s93
      %p99 = scmp.eq.s32.totalorder %s42, 0
      %p100 = por %p98, %p99
      %p101 = scmp.ne.s32.totalorder %s90, %s93
      %p102 = scmp.eq.s32.totalorder %s47, 3
      %p103 = por %p101, %p102
      %p104 = scmp.ne.s32.totalorder %s93, %s94
      %p105 = scmp.eq.s32.totalorder %s47, 0
      %p106 = por %p104, %p105
      %p107 = scmp.ne.s32.totalorder %s93, %s94
      %p108 = scmp.eq.s32.totalorder %s48, 3
      %p109 = por %p107, %p108
      %p111 = scmp.ne.s32.totalorder %s94, %s110
      %p112 = scmp.eq.s32.totalorder %s48, 0
      %p113 = por %p111, %p112
      %s115 = sadd.s32 %s114, 1
      %p118 = scmp.eq.s32.totalorder %s42, 3
      %p119 = scmp.ne.s32.totalorder %s114, %s116
      %p120 = scmp.eq.s32.totalorder %s42, 0
      %p121 = por %p119, %p120
      %p122 = scmp.ne.s32.totalorder %s114, %s116
      %p123 = scmp.eq.s32.totalorder %s47, 3
      %p124 = por %p122, %p123
      %p125 = scmp.ne.s32.totalorder %s116, %s117
      %p126 = scmp.eq.s32.totalorder %s47, 0
      %p127 = por %p125, %p126
      %p128 = scmp.ne.s32.totalorder %s116, %s117
      %p129 = scmp.eq.s32.totalorder %s48, 3
      %p130 = por %p128, %p129
      %p132 = scmp.ne.s32.totalorder %s117, %s131
      %p133 = scmp.eq.s32.totalorder %s48, 0
      %p134 = por %p132, %p133
      %s135 = ssub.s32 %s50, %s57
      %p136 = scmp.eq.s32.totalorder %s135, 0
      %s138 = sadd.s32 %s137, 1
      %s139 = scalar_select %p136, %s137, %s138
      %p142 = pneg %p136
      %p143 = scmp.eq.s32.totalorder %s42, 3
      %p144 = por %p142, %p143
      %p145 = scmp.ne.s32.totalorder %s137, %s140
      %p146 = scmp.eq.s32.totalorder %s42, 0
      %p147 = por %p145, %p146
      %p148 = scmp.ne.s32.totalorder %s137, %s140
      %p149 = scmp.eq.s32.totalorder %s47, 3
      %p150 = por %p148, %p149
      %p151 = scmp.ne.s32.totalorder %s140, %s141
      %p152 = scmp.eq.s32.totalorder %s47, 0
      %p153 = por %p151, %p152
      %p154 = scmp.ne.s32.totalorder %s140, %s141
      %p155 = scmp.eq.s32.totalorder %s48, 3
      %p156 = por %p154, %p155
      %p158 = scmp.ne.s32.totalorder %s141, %s157
      %p159 = scmp.eq.s32.totalorder %s48, 0
      %p160 = por %p158, %p159
      %s161 = ssub.s32 %s50, %s57
      %p162 = scmp.eq.s32.totalorder %s161, 0
      %s164 = sadd.s32 %s163, 1
      %s165 = scalar_select %p162, %s163, %s164
      %p168 = pneg %p162
      %p169 = scmp.eq.s32.totalorder %s42, 3
      %p170 = por %p168, %p169
      %p171 = scmp.ne.s32.totalorder %s163, %s166
      %p172 = scmp.eq.s32.totalorder %s42, 0
      %p173 = por %p171, %p172
      %p174 = scmp.ne.s32.totalorder %s163, %s166
      %p175 = scmp.eq.s32.totalorder %s47, 3
      %p176 = por %p174, %p175
      %p177 = scmp.ne.s32.totalorder %s166, %s167
      %p178 = scmp.eq.s32.totalorder %s47, 0
      %p179 = por %p177, %p178
      %p180 = scmp.ne.s32.totalorder %s166, %s167
      %p181 = scmp.eq.s32.totalorder %s48, 3
      %p182 = por %p180, %p181
      %p184 = scmp.ne.s32.totalorder %s167, %s183
      %p185 = scmp.eq.s32.totalorder %s48, 0
      %p186 = por %p184, %p185
      %s187 = ssub.s32 %s50, %s57
      %p188 = scmp.eq.s32.totalorder %s187, 0
      %s190 = sadd.s32 %s189, 1
      %s191 = scalar_select %p188, %s189, %s190
      %p194 = pneg %p188
      %p195 = scmp.eq.s32.totalorder %s42, 3
      %p196 = por %p194, %p195
      %p197 = scmp.ne.s32.totalorder %s189, %s192
      %p198 = scmp.eq.s32.totalorder %s42, 0
      %p199 = por %p197, %p198
      %p200 = scmp.ne.s32.totalorder %s189, %s192
      %p201 = scmp.eq.s32.totalorder %s47, 3
      %p202 = por %p200, %p201
      %p203 = scmp.ne.s32.totalorder %s192, %s193
      %p204 = scmp.eq.s32.totalorder %s47, 0
      %p205 = por %p203, %p204
      %p206 = scmp.ne.s32.totalorder %s192, %s193
      %p207 = scmp.eq.s32.totalorder %s48, 3
      %p208 = por %p206, %p207
      %p210 = scmp.ne.s32.totalorder %s193, %s209
      %p211 = scmp.eq.s32.totalorder %s48, 0
      %p212 = por %p210, %p211
      %s213 = ssub.s32 %s50, %s57
      %p214 = scmp.eq.s32.totalorder %s213, 0
      %s216 = sadd.s32 %s215, 1
      %s217 = scalar_select %p214, %s215, %s216
      %p220 = pneg %p214
      %p221 = scmp.eq.s32.totalorder %s42, 3
      %p222 = por %p220, %p221
      %p223 = scmp.ne.s32.totalorder %s215, %s218
      %p224 = scmp.eq.s32.totalorder %s42, 0
      %p225 = por %p223, %p224
      %p226 = scmp.ne.s32.totalorder %s215, %s218
      %p227 = scmp.eq.s32.totalorder %s47, 3
      %p228 = por %p226, %p227
      %p229 = scmp.ne.s32.totalorder %s218, %s219
      %p230 = scmp.eq.s32.totalorder %s47, 0
      %p231 = por %p229, %p230
      %p232 = scmp.ne.s32.totalorder %s218, %s219
      %p233 = scmp.eq.s32.totalorder %s48, 3
      %p234 = por %p232, %p233
      %p236 = scmp.ne.s32.totalorder %s219, %s235
      %p237 = scmp.eq.s32.totalorder %s48, 0
      %p238 = por %p236, %p237
      %s239 = ssub.s32 %s50, %s57
      %p240 = scmp.eq.s32.totalorder %s239, 0
      %s242 = sadd.s32 %s241, 1
      %s243 = scalar_select %p240, %s241, %s242
      %p246 = pneg %p240
      %p247 = scmp.eq.s32.totalorder %s42, 3
      %p248 = por %p246, %p247
      %p249 = scmp.ne.s32.totalorder %s241, %s244
      %p250 = scmp.eq.s32.totalorder %s42, 0
      %p251 = por %p249, %p250
      %p252 = scmp.ne.s32.totalorder %s241, %s244
      %p253 = scmp.eq.s32.totalorder %s47, 3
      %p254 = por %p252, %p253
      %p255 = scmp.ne.s32.totalorder %s244, %s245
      %p256 = scmp.eq.s32.totalorder %s47, 0
      %p257 = por %p255, %p256
      %p258 = scmp.ne.s32.totalorder %s244, %s245
      %p259 = scmp.eq.s32.totalorder %s48, 3
      %p260 = por %p258, %p259
      %p262 = scmp.ne.s32.totalorder %s245, %s261
      %p263 = scmp.eq.s32.totalorder %s48, 0
      %p264 = por %p262, %p263
      %s265 = ssub.s32 %s50, %s57
      %p266 = scmp.eq.s32.totalorder %s265, 0
      %s268 = sadd.s32 %s267, 1
      %s269 = scalar_select %p266, %s267, %s268
      %p272 = pneg %p266
      %p273 = scmp.eq.s32.totalorder %s42, 3
      %p274 = por %p272, %p273
      %p275 = scmp.ne.s32.totalorder %s267, %s270
      %p276 = scmp.eq.s32.totalorder %s42, 0
      %p277 = por %p275, %p276
      %p278 = scmp.ne.s32.totalorder %s267, %s270
      %p279 = scmp.eq.s32.totalorder %s47, 3
      %p280 = por %p278, %p279
      %p281 = scmp.ne.s32.totalorder %s270, %s271
      %p282 = scmp.eq.s32.totalorder %s47, 0
      %p283 = por %p281, %p282
      %p284 = scmp.ne.s32.totalorder %s270, %s271
      %p285 = scmp.eq.s32.totalorder %s48, 3
      %p286 = por %p284, %p285
      %p288 = scmp.ne.s32.totalorder %s271, %s287
      %p289 = scmp.eq.s32.totalorder %s48, 0
      %p290 = por %p288, %p289
      %s291 = ssub.s32 %s50, %s57
      %p292 = scmp.eq.s32.totalorder %s291, 0
      %s294 = sadd.s32 %s293, 1
      %s295 = scalar_select %p292, %s293, %s294
      %p298 = pneg %p292
      %p299 = scmp.eq.s32.totalorder %s42, 3
      %p300 = por %p298, %p299
      %p301 = scmp.ne.s32.totalorder %s293, %s296
      %p302 = scmp.eq.s32.totalorder %s42, 0
      %p303 = por %p301, %p302
      %p304 = scmp.ne.s32.totalorder %s293, %s296
      %p305 = scmp.eq.s32.totalorder %s47, 3
      %p306 = por %p304, %p305
      %p307 = scmp.ne.s32.totalorder %s296, %s297
      %p308 = scmp.eq.s32.totalorder %s47, 0
      %p309 = por %p307, %p308
      %p310 = scmp.ne.s32.totalorder %s296, %s297
      %p311 = scmp.eq.s32.totalorder %s48, 3
      %p312 = por %p310, %p311
      %p314 = scmp.ne.s32.totalorder %s297, %s313
      %p315 = scmp.eq.s32.totalorder %s48, 0
      %p316 = por %p314, %p315
      %s317 = ssub.s32 %s50, %s57
      %p318 = scmp.eq.s32.totalorder %s317, 0
      %s320 = sadd.s32 %s319, 1
      %s321 = scalar_select %p318, %s319, %s320
      %p324 = pneg %p318
      %p325 = scmp.eq.s32.totalorder %s42, 3
      %p326 = por %p324, %p325
      %p327 = scmp.ne.s32.totalorder %s319, %s322
      %p328 = scmp.eq.s32.totalorder %s42, 0
      %p329 = por %p327, %p328
      %p330 = scmp.ne.s32.totalorder %s319, %s322
      %p331 = scmp.eq.s32.totalorder %s47, 3
      %p332 = por %p330, %p331
      %p333 = scmp.ne.s32.totalorder %s322, %s323
      %p334 = scmp.eq.s32.totalorder %s47, 0
      %p335 = por %p333, %p334
      %p336 = scmp.ne.s32.totalorder %s322, %s323
      %p337 = scmp.eq.s32.totalorder %s48, 3
      %p338 = por %p336, %p337
      %p340 = scmp.ne.s32.totalorder %s323, %s339
      %p341 = scmp.eq.s32.totalorder %s48, 0
      %p342 = por %p340, %p341
      %s343 = ssub.s32 %s50, %s57
      %p344 = scmp.eq.s32.totalorder %s343, 0
      %s346 = sadd.s32 %s345, 1
      %s347 = scalar_select %p344, %s345, %s346
      %p350 = pneg %p344
      %p351 = scmp.eq.s32.totalorder %s42, 3
      %p352 = por %p350, %p351
      %p353 = scmp.ne.s32.totalorder %s345, %s348
      %p354 = scmp.eq.s32.totalorder %s42, 0
      %p355 = por %p353, %p354
      %p356 = scmp.ne.s32.totalorder %s345, %s348
      %p357 = scmp.eq.s32.totalorder %s47, 3
      %p358 = por %p356, %p357
      %p359 = scmp.ne.s32.totalorder %s348, %s349
      %p360 = scmp.eq.s32.totalorder %s47, 0
      %p361 = por %p359, %p360
      %p362 = scmp.ne.s32.totalorder %s348, %s349
      %p363 = scmp.eq.s32.totalorder %s48, 3
      %p364 = por %p362, %p363
      %p366 = scmp.ne.s32.totalorder %s349, %s365
      %p367 = scmp.eq.s32.totalorder %s48, 0
      %p368 = por %p366, %p367
      %s369 = ssub.s32 %s50, %s57
      %p370 = scmp.eq.s32.totalorder %s369, 0
      %s372 = sadd.s32 %s371, 1
      %s373 = scalar_select %p370, %s371, %s372
      %p376 = pneg %p370
      %p377 = scmp.eq.s32.totalorder %s42, 3
      %p378 = por %p376, %p377
      %p379 = scmp.ne.s32.totalorder %s371, %s374
      %p380 = scmp.eq.s32.totalorder %s42, 0
      %p381 = por %p379, %p380
      %p382 = scmp.ne.s32.totalorder %s371, %s374
      %p383 = scmp.eq.s32.totalorder %s47, 3
      %p384 = por %p382, %p383
      %p385 = scmp.ne.s32.totalorder %s374, %s375
      %p386 = scmp.eq.s32.totalorder %s47, 0
      %p387 = por %p385, %p386
      %p388 = scmp.ne.s32.totalorder %s374, %s375
      %p389 = scmp.eq.s32.totalorder %s48, 3
      %p390 = por %p388, %p389
      %p392 = scmp.ne.s32.totalorder %s375, %s391
      %p393 = scmp.eq.s32.totalorder %s48, 0
      %p394 = por %p392, %p393
      %s395 = ssub.s32 %s50, %s57
      %p396 = scmp.eq.s32.totalorder %s395, 0
      %s398 = sadd.s32 %s397, 1
      %s399 = scalar_select %p396, %s397, %s398
      %p402 = pneg %p396
      %p403 = scmp.eq.s32.totalorder %s42, 3
      %p404 = por %p402, %p403
      %p405 = scmp.ne.s32.totalorder %s397, %s400
      %p406 = scmp.eq.s32.totalorder %s42, 0
      %p407 = por %p405, %p406
      %p408 = scmp.ne.s32.totalorder %s397, %s400
      %p409 = scmp.eq.s32.totalorder %s47, 3
      %p410 = por %p408, %p409
      %p411 = scmp.ne.s32.totalorder %s400, %s401
      %p412 = scmp.eq.s32.totalorder %s47, 0
      %p413 = por %p411, %p412
      %p414 = scmp.ne.s32.totalorder %s400, %s401
      %p415 = scmp.eq.s32.totalorder %s48, 3
      %p416 = por %p414, %p415
      %p418 = scmp.ne.s32.totalorder %s401, %s417
      %p419 = scmp.eq.s32.totalorder %s48, 0
      %p420 = por %p418, %p419
      %s421 = ssub.s32 %s50, %s57
      %p422 = scmp.eq.s32.totalorder %s421, 0
      %s424 = sadd.s32 %s423, 1
      %s425 = scalar_select %p422, %s423, %s424
      %p428 = pneg %p422
      %p429 = scmp.eq.s32.totalorder %s42, 3
      %p430 = por %p428, %p429
      %p431 = scmp.ne.s32.totalorder %s423, %s426
      %p432 = scmp.eq.s32.totalorder %s42, 0
      %p433 = por %p431, %p432
      %p434 = scmp.ne.s32.totalorder %s423, %s426
      %p435 = scmp.eq.s32.totalorder %s47, 3
      %p436 = por %p434, %p435
      %p437 = scmp.ne.s32.totalorder %s426, %s427
      %p438 = scmp.eq.s32.totalorder %s47, 0
      %p439 = por %p437, %p438
      %p440 = scmp.ne.s32.totalorder %s426, %s427
      %p441 = scmp.eq.s32.totalorder %s48, 3
      %p442 = por %p440, %p441
      %p444 = scmp.ne.s32.totalorder %s427, %s443
      %p445 = scmp.eq.s32.totalorder %s48, 0
      %p446 = por %p444, %p445
      %s447 = ssub.s32 %s49, %s61
      %p448 = scmp.eq.s32.totalorder %s447, 0
      %s450 = sadd.s32 %s449, 1
      %s451 = scalar_select %p448, %s449, %s450
      %p454 = pneg %p448
      %p455 = scmp.eq.s32.totalorder %s42, 3
      %p456 = por %p454, %p455
      %p457 = scmp.ne.s32.totalorder %s449, %s452
      %p458 = scmp.eq.s32.totalorder %s42, 0
      %p459 = por %p457, %p458
      %p460 = scmp.ne.s32.totalorder %s449, %s452
      %p461 = scmp.eq.s32.totalorder %s47, 3
      %p462 = por %p460, %p461
      %p463 = scmp.ne.s32.totalorder %s452, %s453
      %p464 = scmp.eq.s32.totalorder %s47, 0
      %p465 = por %p463, %p464
      %p466 = scmp.ne.s32.totalorder %s452, %s453
      %p467 = scmp.eq.s32.totalorder %s48, 3
      %p468 = por %p466, %p467
      %p470 = scmp.ne.s32.totalorder %s453, %s469
      %p471 = scmp.eq.s32.totalorder %s48, 0
      %p472 = por %p470, %p471
      %p473 = scmp.le.s32.totalorder 1, %s42
      %p474 = scmp.lt.s32.totalorder %s42, 5
      %p475 = pnand %p473, %p474
      %p476 = pneg %p475
      // Predicated region
      $region9: #{tpu_custom_call.1} parent=5 // pred_check
        _
      $region10: #{tpu_custom_call.1} parent=5 // pred_check_branch
        %478 = sbr.rel (%p475) target = $region12
      $region11: #{tpu_custom_call.1} parent=5 // pred_region
        %s479 = ssub.s32 %s42, 1
        // Predicated region
        $region13: #{tpu_custom_call.1} parent=11 // pred_check
          %p480 = pneg %p127
        $region14: #{tpu_custom_call.1} parent=11 // pred_check_branch
          %482 = sbr.rel (%p480) target = $region16
        $region15: #{tpu_custom_call.1} parent=11 // pred_region
          %484 = vsyncadd [#allocation7], 0
          %s486 = sshll.u32 %s2, 4
          %s487 = int_to_ptr.hbm [resolvable:$true] %s486
          %s488 = sshll.u32 [#allocation8], 4
          %s489 = int_to_ptr.vmem [resolvable:$true] %s488
          %491 = dma.hbm_to_vmem [thread:$0]  %s487, 128, %s489, [#allocation7]
        $region16: #{tpu_custom_call.1} parent=11 // pred_fallthru
          _
      $region12: #{tpu_custom_call.1} parent=5 // pred_fallthru
        _
      %p492 = scmp.lt.s32.totalorder %s42, 4
      // Predicated region
      $region17: #{tpu_custom_call.1} parent=5 // pred_check
        %p493 = pneg %p492
      $region18: #{tpu_custom_call.1} parent=5 // pred_check_branch
        %495 = sbr.rel (%p493) target = $region20
      $region19: #{tpu_custom_call.1} parent=5 // pred_region
        // Predicated region
        $region21: #{tpu_custom_call.1} parent=19 // pred_check
          %p496 = pneg %p74
        $region22: #{tpu_custom_call.1} parent=19 // pred_check_branch
          %498 = sbr.rel (%p496) target = $region24
        $region23: #{tpu_custom_call.1} parent=19 // pred_region
          %s499 = sand.u32 %s64, 1
          %s500 = scalar_lea.sflag [#allocation4], %s499
          %s501 = sand.u32 %s64, 1
          %s502 = smul.addr %s501, 8
          %s503 = scalar_lea.vmem [#allocation3], %s502
          %505 = vsyncadd %s500, 0
          %s506 = smul.addr %s49, 8
          %s507 = scalar_lea.hbm %s0, %s506
          %s509 = sshll.u32 %s507, 4
          %s510 = int_to_ptr.hbm [resolvable:$true] %s509
          %s511 = sshll.u32 %s503, 4
          %s512 = int_to_ptr.vmem [resolvable:$true] %s511
          %514 = dma.hbm_to_vmem [thread:$0]  %s510, 128, %s512, %s500
        $region24: #{tpu_custom_call.1} parent=19 // pred_fallthru
          _
        // Predicated region
        $region25: #{tpu_custom_call.1} parent=19 // pred_check
          %p515 = pneg %p100
        $region26: #{tpu_custom_call.1} parent=19 // pred_check_branch
          %517 = sbr.rel (%p515) target = $region28
        $region27: #{tpu_custom_call.1} parent=19 // pred_region
          %s518 = sand.u32 %s42, 1
          %s519 = scalar_lea.sflag [#allocation7], %s518
          %s520 = sand.u32 %s90, 1
          %s521 = smul.addr %s520, 4
          %s522 = scalar_lea.vmem [#allocation6], %s521
          %524 = vsyncadd %s519, 0
          %s525 = smul.addr %s49, 4
          %s526 = scalar_lea.hbm %s1, %s525
          %s528 = sshll.u32 %s526, 4
          %s529 = int_to_ptr.hbm [resolvable:$true] %s528
          %s530 = sshll.u32 %s522, 4
          %s531 = int_to_ptr.vmem [resolvable:$true] %s530
          %533 = dma.hbm_to_vmem [thread:$0]  %s529, 64, %s531, %s519
        $region28: #{tpu_custom_call.1} parent=19 // pred_fallthru
          _
        // Predicated region
        $region29: #{tpu_custom_call.1} parent=19 // pred_check
          %p534 = pneg %p147
        $region30: #{tpu_custom_call.1} parent=19 // pred_check_branch
          %536 = sbr.rel (%p534) target = $region32
        $region31: #{tpu_custom_call.1} parent=19 // pred_region
          %s537 = sand.u32 %s42, 1
          %s538 = scalar_lea.sflag [#allocation10], %s537
          %s539 = sand.u32 %s137, 1
          %s540 = smul.addr %s539, 192
          %s541 = scalar_lea.vmem [#allocation9], %s540
          %543 = vsyncadd %s538, 0
          %s544 = smul.addr %s50, 48
          %s545 = smul.addr %s544, 4
          %s546 = scalar_lea.hbm %s3, %s545
          %s547 = sshll.u32 %s546, 4
          %s548 = int_to_ptr.hbm [resolvable:$true] %s547
          %s549 = sshll.u32 %s541, 4
          %s550 = int_to_ptr.vmem [resolvable:$true] %s549
          %555 = dma.hbm_to_vmem [thread:$0]  %s548, 3072, %s550, %s538, 192, 192, 12
        $region32: #{tpu_custom_call.1} parent=19 // pred_fallthru
          _
        // Predicated region
        $region33: #{tpu_custom_call.1} parent=19 // pred_check
          %p556 = pneg %p173
        $region34: #{tpu_custom_call.1} parent=19 // pred_check_branch
          %558 = sbr.rel (%p556) target = $region36
        $region35: #{tpu_custom_call.1} parent=19 // pred_region
          %s559 = sand.u32 %s42, 1
          %s560 = scalar_lea.sflag [#allocation10], %s559
          %s561 = sand.u32 %s163, 1
          %s562 = smul.addr %s561, 3
          %s563 = scalar_lea.vmem [#allocation11], %s562
          %565 = vsyncadd %s560, 0
          %s566 = smul.addr %s50, 3
          %s567 = scalar_lea.hbm %s4, %s566
          %s569 = sshll.u32 %s567, 4
          %s570 = int_to_ptr.hbm [resolvable:$true] %s569
          %s571 = sshll.u32 %s563, 4
          %s572 = int_to_ptr.vmem [resolvable:$true] %s571
          %574 = dma.hbm_to_vmem [thread:$0]  %s570, 48, %s572, %s560
        $region36: #{tpu_custom_call.1} parent=19 // pred_fallthru
          _
        // Predicated region
        $region37: #{tpu_custom_call.1} parent=19 // pred_check
          %p575 = pneg %p199
        $region38: #{tpu_custom_call.1} parent=19 // pred_check_branch
          %577 = sbr.rel (%p575) target = $region40
        $region39: #{tpu_custom_call.1} parent=19 // pred_region
          %s578 = sand.u32 %s42, 1
          %s579 = scalar_lea.sflag [#allocation13], %s578
          %s580 = sand.u32 %s189, 1
          %s581 = smul.addr %s580, 64
          %s582 = scalar_lea.vmem [#allocation12], %s581
          %584 = vsyncadd %s579, 0
          %s585 = smul.addr %s50, 16
          %s586 = smul.addr %s585, 4
          %s587 = scalar_lea.hbm %s5, %s586
          %s588 = sshll.u32 %s587, 4
          %s589 = int_to_ptr.hbm [resolvable:$true] %s588
          %s590 = sshll.u32 %s582, 4
          %s591 = int_to_ptr.vmem [resolvable:$true] %s590
          %596 = dma.hbm_to_vmem [thread:$0]  %s589, 1024, %s591, %s579, 64, 64, 4
        $region40: #{tpu_custom_call.1} parent=19 // pred_fallthru
          _
        // Predicated region
        $region41: #{tpu_custom_call.1} parent=19 // pred_check
          %p597 = pneg %p225
        $region42: #{tpu_custom_call.1} parent=19 // pred_check_branch
          %599 = sbr.rel (%p597) target = $region44
        $region43: #{tpu_custom_call.1} parent=19 // pred_region
          %p600 = scmp.lt.s32.totalorder %s50, 1
          %s601 = scalar_select %p600, %s50, 1
          %s602 = scalar_lea.vmem %s6, %s601
        $region44: #{tpu_custom_call.1} parent=19 // pred_fallthru
          _
        // Predicated region
        $region45: #{tpu_custom_call.1} parent=19 // pred_check
          %p603 = pneg %p251
        $region46: #{tpu_custom_call.1} parent=19 // pred_check_branch
          %605 = sbr.rel (%p603) target = $region48
        $region47: #{tpu_custom_call.1} parent=19 // pred_region
          %s606 = sand.u32 %s42, 1
          %s607 = scalar_lea.sflag [#allocation13], %s606
          %s608 = sand.u32 %s241, 1
          %s609 = scalar_lea.vmem [#allocation14], %s608
          %611 = vsyncadd %s607, 0
          %s612 = scalar_lea.hbm %s7, %s50
          %s614 = sshll.u32 %s612, 4
          %s615 = int_to_ptr.hbm [resolvable:$true] %s614
          %s616 = sshll.u32 %s609, 4
          %s617 = int_to_ptr.vmem [resolvable:$true] %s616
          %619 = dma.hbm_to_vmem [thread:$0]  %s615, 16, %s617, %s607
        $region48: #{tpu_custom_call.1} parent=19 // pred_fallthru
          _
        // Predicated region
        $region49: #{tpu_custom_call.1} parent=19 // pred_check
          %p620 = pneg %p277
        $region50: #{tpu_custom_call.1} parent=19 // pred_check_branch
          %622 = sbr.rel (%p620) target = $region52
        $region51: #{tpu_custom_call.1} parent=19 // pred_region
          %s623 = sand.u32 %s42, 1
          %s624 = scalar_lea.sflag [#allocation16], %s623
          %s625 = sand.u32 %s267, 1
          %s626 = scalar_lea.vmem [#allocation15], %s625
          %628 = vsyncadd %s624, 0
          %s629 = scalar_lea.hbm %s8, %s50
          %s631 = sshll.u32 %s629, 4
          %s632 = int_to_ptr.hbm [resolvable:$true] %s631
          %s633 = sshll.u32 %s626, 4
          %s634 = int_to_ptr.vmem [resolvable:$true] %s633
          %636 = dma.hbm_to_vmem [thread:$0]  %s632, 16, %s634, %s624
        $region52: #{tpu_custom_call.1} parent=19 // pred_fallthru
          _
        // Predicated region
        $region53: #{tpu_custom_call.1} parent=19 // pred_check
          %p637 = pneg %p303
        $region54: #{tpu_custom_call.1} parent=19 // pred_check_branch
          %639 = sbr.rel (%p637) target = $region56
        $region55: #{tpu_custom_call.1} parent=19 // pred_region
          %s640 = sand.u32 %s42, 1
          %s641 = scalar_lea.sflag [#allocation16], %s640
          %s642 = sand.u32 %s293, 1
          %s643 = smul.addr %s642, 128
          %s644 = scalar_lea.vmem [#allocation17], %s643
          %646 = vsyncadd %s641, 0
          %s647 = smul.addr %s50, 32
          %s648 = smul.addr %s647, 4
          %s649 = scalar_lea.hbm %s9, %s648
          %s650 = sshll.u32 %s649, 4
          %s651 = int_to_ptr.hbm [resolvable:$true] %s650
          %s652 = sshll.u32 %s644, 4
          %s653 = int_to_ptr.vmem [resolvable:$true] %s652
          %658 = dma.hbm_to_vmem [thread:$0]  %s651, 2048, %s653, %s641, 128, 128, 8
        $region56: #{tpu_custom_call.1} parent=19 // pred_fallthru
          _
        // Predicated region
        $region57: #{tpu_custom_call.1} parent=19 // pred_check
          %p659 = pneg %p329
        $region58: #{tpu_custom_call.1} parent=19 // pred_check_branch
          %661 = sbr.rel (%p659) target = $region60
        $region59: #{tpu_custom_call.1} parent=19 // pred_region
          %p662 = scmp.lt.s32.totalorder %s50, 1
          %s663 = scalar_select %p662, %s50, 1
          %s664 = smul.addr %s663, 2
          %s665 = scalar_lea.vmem %s10, %s664
        $region60: #{tpu_custom_call.1} parent=19 // pred_fallthru
          _
        // Predicated region
        $region61: #{tpu_custom_call.1} parent=19 // pred_check
          %p666 = pneg %p355
        $region62: #{tpu_custom_call.1} parent=19 // pred_check_branch
          %668 = sbr.rel (%p666) target = $region64
        $region63: #{tpu_custom_call.1} parent=19 // pred_region
          %s669 = sand.u32 %s345, 1
          %s670 = scalar_lea.sflag [#allocation19], %s669
          %s671 = sand.u32 %s345, 1
          %s672 = smul.addr %s671, 128
          %s673 = scalar_lea.vmem [#allocation18], %s672
          %675 = vsyncadd %s670, 0
          %s676 = smul.addr %s50, 32
          %s677 = smul.addr %s676, 4
          %s678 = scalar_lea.hbm %s11, %s677
          %s679 = sshll.u32 %s678, 4
          %s680 = int_to_ptr.hbm [resolvable:$true] %s679
          %s681 = sshll.u32 %s673, 4
          %s682 = int_to_ptr.vmem [resolvable:$true] %s681
          %687 = dma.hbm_to_vmem [thread:$0]  %s680, 2048, %s682, %s670, 64, 64, 4
        $region64: #{tpu_custom_call.1} parent=19 // pred_fallthru
          _
        // Predicated region
        $region65: #{tpu_custom_call.1} parent=19 // pred_check
          %p688 = pneg %p381
        $region66: #{tpu_custom_call.1} parent=19 // pred_check_branch
          %690 = sbr.rel (%p688) target = $region68
        $region67: #{tpu_custom_call.1} parent=19 // pred_region
          %p691 = scmp.lt.s32.totalorder %s50, 1
          %s692 = scalar_select %p691, %s50, 1
          %s693 = scalar_lea.vmem %s12, %s692
        $region68: #{tpu_custom_call.1} parent=19 // pred_fallthru
          _
        // Predicated region
        $region69: #{tpu_custom_call.1} parent=19 // pred_check
          %p694 = pneg %p407
        $region70: #{tpu_custom_call.1} parent=19 // pred_check_branch
          %696 = sbr.rel (%p694) target = $region72
        $region71: #{tpu_custom_call.1} parent=19 // pred_region
          %p697 = scmp.lt.s32.totalorder %s50, 1
          %s698 = scalar_select %p697, %s50, 1
          %s699 = scalar_lea.vmem %s13, %s698
        $region72: #{tpu_custom_call.1} parent=19 // pred_fallthru
          _
        // Predicated region
        $region73: #{tpu_custom_call.1} parent=19 // pred_check
          %p700 = pneg %p433
        $region74: #{tpu_custom_call.1} parent=19 // pred_check_branch
          %702 = sbr.rel (%p700) target = $region76
        $region75: #{tpu_custom_call.1} parent=19 // pred_region
          %p703 = scmp.lt.s32.totalorder %s50, 1
          %s704 = scalar_select %p703, %s50, 1
          %s705 = scalar_lea.vmem %s14, %s704
        $region76: #{tpu_custom_call.1} parent=19 // pred_fallthru
          _
      $region20: #{tpu_custom_call.1} parent=5 // pred_fallthru
        _
      %p706 = scmp.le.s32.totalorder 1, %s42
      %p707 = scmp.lt.s32.totalorder %s42, 5
      %p708 = pnand %p706, %p707
      %p709 = pneg %p708
      // Predicated region
      $region77: #{tpu_custom_call.1} parent=5 // pred_check
        _
      $region78: #{tpu_custom_call.1} parent=5 // pred_check_branch
        %711 = sbr.rel (%p708) target = $region80
      $region79: #{tpu_custom_call.1} parent=5 // pred_region
        %s712 = ssub.s32 %s42, 1
        %s713 = sand.u32 %s67, 1
        %s714 = scalar_lea.sflag [#allocation4], %s713
        %s715 = sand.u32 %s67, 1
        %s716 = smul.addr %s715, 8
        %s717 = scalar_lea.vmem [#allocation3], %s716
        // Predicated region
        $region81: #{tpu_custom_call.1} parent=79 // pred_check
          %p718 = pneg %p80
        $region82: #{tpu_custom_call.1} parent=79 // pred_check_branch
          %720 = sbr.rel (%p718) target = $region84
        $region83: #{tpu_custom_call.1} parent=79 // pred_region
          %722 = dma.done %s714, 128
        $region84: #{tpu_custom_call.1} parent=79 // pred_fallthru
          _
        %s723 = sand.u32 %s47, 1
        %s724 = scalar_lea.sflag [#allocation7], %s723
        %s725 = sand.u32 %s93, 1
        %s726 = smul.addr %s725, 4
        %s727 = scalar_lea.vmem [#allocation6], %s726
        // Predicated region
        $region85: #{tpu_custom_call.1} parent=79 // pred_check
          %p728 = pneg %p106
        $region86: #{tpu_custom_call.1} parent=79 // pred_check_branch
          %730 = sbr.rel (%p728) target = $region88
        $region87: #{tpu_custom_call.1} parent=79 // pred_region
          %732 = dma.done %s724, 64
        $region88: #{tpu_custom_call.1} parent=79 // pred_fallthru
          _
        // Predicated region
        $region89: #{tpu_custom_call.1} parent=79 // pred_check
          %p733 = pneg %p127
        $region90: #{tpu_custom_call.1} parent=79 // pred_check_branch
          %735 = sbr.rel (%p733) target = $region92
        $region91: #{tpu_custom_call.1} parent=79 // pred_region
          %737 = dma.done [#allocation7], 128
        $region92: #{tpu_custom_call.1} parent=79 // pred_fallthru
          _
        %s738 = sand.u32 %s47, 1
        %s739 = scalar_lea.sflag [#allocation10], %s738
        %s740 = sand.u32 %s140, 1
        %s741 = smul.addr %s740, 192
        %s742 = scalar_lea.vmem [#allocation9], %s741
        // Predicated region
        $region93: #{tpu_custom_call.1} parent=79 // pred_check
          %p743 = pneg %p153
        $region94: #{tpu_custom_call.1} parent=79 // pred_check_branch
          %745 = sbr.rel (%p743) target = $region96
        $region95: #{tpu_custom_call.1} parent=79 // pred_region
          %747 = dma.done %s739, 3072
        $region96: #{tpu_custom_call.1} parent=79 // pred_fallthru
          _
        %s748 = sand.u32 %s47, 1
        %s749 = scalar_lea.sflag [#allocation10], %s748
        %s750 = sand.u32 %s166, 1
        %s751 = smul.addr %s750, 3
        %s752 = scalar_lea.vmem [#allocation11], %s751
        // Predicated region
        $region97: #{tpu_custom_call.1} parent=79 // pred_check
          %p753 = pneg %p179
        $region98: #{tpu_custom_call.1} parent=79 // pred_check_branch
          %755 = sbr.rel (%p753) target = $region100
        $region99: #{tpu_custom_call.1} parent=79 // pred_region
          %757 = dma.done %s749, 48
        $region100: #{tpu_custom_call.1} parent=79 // pred_fallthru
          _
        %s758 = sand.u32 %s47, 1
        %s759 = scalar_lea.sflag [#allocation13], %s758
        %s760 = sand.u32 %s192, 1
        %s761 = smul.addr %s760, 64
        %s762 = scalar_lea.vmem [#allocation12], %s761
        // Predicated region
        $region101: #{tpu_custom_call.1} parent=79 // pred_check
          %p763 = pneg %p205
        $region102: #{tpu_custom_call.1} parent=79 // pred_check_branch
          %765 = sbr.rel (%p763) target = $region104
        $region103: #{tpu_custom_call.1} parent=79 // pred_region
          %767 = dma.done %s759, 1024
        $region104: #{tpu_custom_call.1} parent=79 // pred_fallthru
          _
        %s768 = sand.u32 %s47, 1
        %s769 = scalar_lea.sflag [#allocation13], %s768
        %s770 = sand.u32 %s244, 1
        %s771 = scalar_lea.vmem [#allocation14], %s770
        // Predicated region
        $region105: #{tpu_custom_call.1} parent=79 // pred_check
          %p772 = pneg %p257
        $region106: #{tpu_custom_call.1} parent=79 // pred_check_branch
          %774 = sbr.rel (%p772) target = $region108
        $region107: #{tpu_custom_call.1} parent=79 // pred_region
          %776 = dma.done %s769, 16
        $region108: #{tpu_custom_call.1} parent=79 // pred_fallthru
          _
        %s777 = sand.u32 %s47, 1
        %s778 = scalar_lea.sflag [#allocation16], %s777
        %s779 = sand.u32 %s270, 1
        %s780 = scalar_lea.vmem [#allocation15], %s779
        // Predicated region
        $region109: #{tpu_custom_call.1} parent=79 // pred_check
          %p781 = pneg %p283
        $region110: #{tpu_custom_call.1} parent=79 // pred_check_branch
          %783 = sbr.rel (%p781) target = $region112
        $region111: #{tpu_custom_call.1} parent=79 // pred_region
          %785 = dma.done %s778, 16
        $region112: #{tpu_custom_call.1} parent=79 // pred_fallthru
          _
        %s786 = sand.u32 %s47, 1
        %s787 = scalar_lea.sflag [#allocation16], %s786
        %s788 = sand.u32 %s296, 1
        %s789 = smul.addr %s788, 128
        %s790 = scalar_lea.vmem [#allocation17], %s789
        // Predicated region
        $region113: #{tpu_custom_call.1} parent=79 // pred_check
          %p791 = pneg %p309
        $region114: #{tpu_custom_call.1} parent=79 // pred_check_branch
          %793 = sbr.rel (%p791) target = $region116
        $region115: #{tpu_custom_call.1} parent=79 // pred_region
          %795 = dma.done %s787, 2048
        $region116: #{tpu_custom_call.1} parent=79 // pred_fallthru
          _
        %s796 = sand.u32 %s348, 1
        %s797 = scalar_lea.sflag [#allocation19], %s796
        %s798 = sand.u32 %s348, 1
        %s799 = smul.addr %s798, 128
        %s800 = scalar_lea.vmem [#allocation18], %s799
        // Predicated region
        $region117: #{tpu_custom_call.1} parent=79 // pred_check
          %p801 = pneg %p361
        $region118: #{tpu_custom_call.1} parent=79 // pred_check_branch
          %803 = sbr.rel (%p801) target = $region120
        $region119: #{tpu_custom_call.1} parent=79 // pred_region
          %805 = dma.done %s797, 2048
        $region120: #{tpu_custom_call.1} parent=79 // pred_fallthru
          _
        %s806 = sand.u32 %s67, 1
        %s807 = scalar_lea.sflag [#allocation4], %s806
        %s808 = sand.u32 %s67, 1
        %s809 = smul.addr %s808, 8
        %s810 = scalar_lea.vmem [#allocation3], %s809
        %p811 = pneg %p80
        %p812 = pneg %p77
        %s813 = sand.u32 %s47, 1
        %s814 = scalar_lea.sflag [#allocation7], %s813
        %s815 = sand.u32 %s93, 1
        %s816 = smul.addr %s815, 4
        %s817 = scalar_lea.vmem [#allocation6], %s816
        %p818 = pneg %p106
        %p819 = pneg %p103
        %p820 = pneg %p127
        %p821 = pneg %p124
        %s822 = sand.u32 %s47, 1
        %s823 = scalar_lea.sflag [#allocation10], %s822
        %s824 = sand.u32 %s140, 1
        %s825 = smul.addr %s824, 192
        %s826 = scalar_lea.vmem [#allocation9], %s825
        %p827 = pneg %p153
        %p828 = pneg %p150
        %s829 = sand.u32 %s47, 1
        %s830 = scalar_lea.sflag [#allocation10], %s829
        %s831 = sand.u32 %s166, 1
        %s832 = smul.addr %s831, 3
        %s833 = scalar_lea.vmem [#allocation11], %s832
        %p834 = pneg %p179
        %p835 = pneg %p176
        %s836 = sand.u32 %s47, 1
        %s837 = scalar_lea.sflag [#allocation13], %s836
        %s838 = sand.u32 %s192, 1
        %s839 = smul.addr %s838, 64
        %s840 = scalar_lea.vmem [#allocation12], %s839
        %p841 = pneg %p205
        %p842 = pneg %p202
        %p843 = scmp.lt.s32.totalorder %s52, 1
        %s844 = scalar_select %p843, %s52, 1
        %s845 = scalar_lea.vmem %s6, %s844
        %p846 = pneg %p231
        %p847 = pneg %p228
        %s848 = sand.u32 %s47, 1
        %s849 = scalar_lea.sflag [#allocation13], %s848
        %s850 = sand.u32 %s244, 1
        %s851 = scalar_lea.vmem [#allocation14], %s850
        %p852 = pneg %p257
        %p853 = pneg %p254
        %s854 = sand.u32 %s47, 1
        %s855 = scalar_lea.sflag [#allocation16], %s854
        %s856 = sand.u32 %s270, 1
        %s857 = scalar_lea.vmem [#allocation15], %s856
        %p858 = pneg %p283
        %p859 = pneg %p280
        %s860 = sand.u32 %s47, 1
        %s861 = scalar_lea.sflag [#allocation16], %s860
        %s862 = sand.u32 %s296, 1
        %s863 = smul.addr %s862, 128
        %s864 = scalar_lea.vmem [#allocation17], %s863
        %p865 = pneg %p309
        %p866 = pneg %p306
        %p867 = scmp.lt.s32.totalorder %s52, 1
        %s868 = scalar_select %p867, %s52, 1
        %s869 = smul.addr %s868, 2
        %s870 = scalar_lea.vmem %s10, %s869
        %p871 = pneg %p335
        %p872 = pneg %p332
        %s873 = sand.u32 %s348, 1
        %s874 = scalar_lea.sflag [#allocation19], %s873
        %s875 = sand.u32 %s348, 1
        %s876 = smul.addr %s875, 128
        %s877 = scalar_lea.vmem [#allocation18], %s876
        %p878 = pneg %p361
        %p879 = pneg %p358
        %p880 = scmp.lt.s32.totalorder %s52, 1
        %s881 = scalar_select %p880, %s52, 1
        %s882 = scalar_lea.vmem %s12, %s881
        %p883 = pneg %p387
        %p884 = pneg %p384
        %p885 = scmp.lt.s32.totalorder %s52, 1
        %s886 = scalar_select %p885, %s52, 1
        %s887 = scalar_lea.vmem %s13, %s886
        %p888 = pneg %p413
        %p889 = pneg %p410
        %p890 = scmp.lt.s32.totalorder %s52, 1
        %s891 = scalar_select %p890, %s52, 1
        %s892 = scalar_lea.vmem %s14, %s891
        %p893 = pneg %p439
        %p894 = pneg %p436
        %p895 = pneg %p465
        %p896 = pneg %p462
        %s897 = sand.u32 %s452, 1
        %s898 = scalar_lea.sflag [#allocation5], %s897
        %s899 = sand.u32 %s452, 1
        %s900 = smul.addr %s899, 8
        %s901 = scalar_lea.vmem [#allocation20], %s900
        %p902 = scmp.lt.s32.totalorder %s52, 1
        %s903 = scalar_select %p902, %s52, 1
        %s904 = scalar_lea.vmem %s6, %s903
        %p905 = scmp.lt.s32.totalorder %s52, 1
        %s906 = scalar_select %p905, %s52, 1
        %s907 = smul.addr %s906, 2
        %s908 = scalar_lea.vmem %s10, %s907
        %p909 = scmp.lt.s32.totalorder %s52, 1
        %s910 = scalar_select %p909, %s52, 1
        %s911 = scalar_lea.vmem %s12, %s910
        %p912 = scmp.lt.s32.totalorder %s52, 1
        %s913 = scalar_select %p912, %s52, 1
        %s914 = scalar_lea.vmem %s13, %s913
        %p915 = scmp.lt.s32.totalorder %s52, 1
        %s916 = scalar_select %p915, %s52, 1
        %s917 = scalar_lea.vmem %s14, %s916
        %p919 = scmp.eq.s32.totalorder %s52, 0
        // Predicated region
        $region121: #{tpu_custom_call.1} parent=79 // pred_check
          %p920 = pneg %p919
        $region122: #{tpu_custom_call.1} parent=79 // pred_check_branch
          %922 = sbr.rel (%p920) target = $region124
        $region123: #{tpu_custom_call.1} parent=79 // pred_region
          %v923 = vld [vmem:[#allocation8] sm:$0xff]
          %v924 = vld [vmem:[%s717] sm:$0xff]
          %v925 = vmul.f32 %v924, 11.313708
          %v926 = vadd.f32 %v925, %v923
          %927 = vst [vmem:[#allocation2] sm:$0xff] %v926
        $region124: #{tpu_custom_call.1} parent=79 // pred_fallthru
          _
        %v928 = vld [vmem:[#allocation2] sm:$0xff]
        %v929 = vpack.c.bf16 %v928, %v928
        %v930 = vld [vmem:[%s742] sm:$0xff]
        %v931 = vld [vmem:[%s742 + $0x8] sm:$0xf]
        %v932 = vld [vmem:[%s742 + $0xc] sm:$0xff]
        %v933 = vld [vmem:[%s742 + $0x14] sm:$0xf]
        %v934 = vld [vmem:[%s742 + $0x18] sm:$0xff]
        %v935 = vld [vmem:[%s742 + $0x20] sm:$0xf]
        %v936 = vld [vmem:[%s742 + $0x24] sm:$0xff]
        %v937 = vld [vmem:[%s742 + $0x2c] sm:$0xf]
        %v938 = vld [vmem:[%s742 + $0x30] sm:$0xff]
        %v939 = vld [vmem:[%s742 + $0x38] sm:$0xf]
        %v940 = vld [vmem:[%s742 + $0x3c] sm:$0xff]
        %v941 = vld [vmem:[%s742 + $0x44] sm:$0xf]
        %v942 = vld [vmem:[%s742 + $0x48] sm:$0xff]
        %v943 = vld [vmem:[%s742 + $0x50] sm:$0xf]
        %v944 = vld [vmem:[%s742 + $0x54] sm:$0xff]
        %v945 = vld [vmem:[%s742 + $0x5c] sm:$0xf]
        %v946 = vld [vmem:[%s742 + $0x60] sm:$0xff]
        %v947 = vld [vmem:[%s742 + $0x68] sm:$0xf]
        %v948 = vld [vmem:[%s742 + $0x6c] sm:$0xff]
        %v949 = vld [vmem:[%s742 + $0x74] sm:$0xf]
        %v950 = vld [vmem:[%s742 + $0x78] sm:$0xff]
        %v951 = vld [vmem:[%s742 + $0x80] sm:$0xf]
        %v952 = vld [vmem:[%s742 + $0x84] sm:$0xff]
        %v953 = vld [vmem:[%s742 + $0x8c] sm:$0xf]
        %v954 = vld [vmem:[%s742 + $0x90] sm:$0xff]
        %v955 = vld [vmem:[%s742 + $0x98] sm:$0xf]
        %v956 = vld [vmem:[%s742 + $0x9c] sm:$0xff]
        %v957 = vld [vmem:[%s742 + $0xa4] sm:$0xf]
        %v958 = vld [vmem:[%s742 + $0xa8] sm:$0xff]
        %v959 = vld [vmem:[%s742 + $0xb0] sm:$0xf]
        %v960 = vld [vmem:[%s742 + $0xb4] sm:$0xff]
        %v961 = vld [vmem:[%s742 + $0xbc] sm:$0xf]
        %v962 = vld [vmem:[%s752] sm:$0x7]
        %v964 = vperm.slane %v962, 0
        %v965 = vperm.slane %v962, 1
        %v966 = vperm.slane %v962, 2
        %v1002 = vunpack.c.l.b16 %v930
        %v1003 = vunpack.c.h.b16 %v930
        %v1004 = vunpack.c.l.b16 %v931
        %v1005 = vunpack.c.l.b16 %v932
        %v1006 = vunpack.c.h.b16 %v932
        %v1007 = vunpack.c.l.b16 %v933
        %v1008 = vunpack.c.l.b16 %v934
        %v1009 = vunpack.c.h.b16 %v934
        %v1010 = vunpack.c.l.b16 %v935
        %v1011 = vunpack.c.l.b16 %v936
        %v1012 = vunpack.c.h.b16 %v936
        %v1013 = vunpack.c.l.b16 %v937
        %v1014 = vunpack.c.l.b16 %v938
        %v1015 = vunpack.c.h.b16 %v938
        %v1016 = vunpack.c.l.b16 %v939
        %v1017 = vunpack.c.l.b16 %v940
        %v1018 = vunpack.c.h.b16 %v940
        %v1019 = vunpack.c.l.b16 %v941
        %v1020 = vunpack.c.l.b16 %v942
        %v1021 = vunpack.c.h.b16 %v942
        %v1022 = vunpack.c.l.b16 %v943
        %v1023 = vunpack.c.l.b16 %v944
        %v1024 = vunpack.c.h.b16 %v944
        %v1025 = vunpack.c.l.b16 %v945
        %v1026 = vunpack.c.l.b16 %v946
        %v1027 = vunpack.c.h.b16 %v946
        %v1028 = vunpack.c.l.b16 %v947
        %v1029 = vunpack.c.l.b16 %v948
        %v1030 = vunpack.c.h.b16 %v948
        %v1031 = vunpack.c.l.b16 %v949
        %v1032 = vunpack.c.l.b16 %v950
        %v1033 = vunpack.c.h.b16 %v950
        %v1034 = vunpack.c.l.b16 %v951
        %v1035 = vunpack.c.l.b16 %v952
        %v1036 = vunpack.c.h.b16 %v952
        %v1037 = vunpack.c.l.b16 %v953
        %v1038 = vunpack.c.l.b16 %v954
        %v1039 = vunpack.c.h.b16 %v954
        %v1040 = vunpack.c.l.b16 %v955
        %v1041 = vunpack.c.l.b16 %v956
        %v1042 = vunpack.c.h.b16 %v956
        %v1043 = vunpack.c.l.b16 %v957
        %v1044 = vunpack.c.l.b16 %v958
        %v1045 = vunpack.c.h.b16 %v958
        %v1046 = vunpack.c.l.b16 %v959
        %v1047 = vunpack.c.l.b16 %v960
        %v1048 = vunpack.c.h.b16 %v960
        %v1049 = vunpack.c.l.b16 %v961
        %v1050 = vpack.c.b16 %v1005, %v1002
        %v1051 = vpack.c.b16 %v1006, %v1003
        %v1052 = vpack.c.b16 %v1007, %v1004
        %v1053 = vpack.c.b16 %v1011, %v1008
        %v1054 = vpack.c.b16 %v1012, %v1009
        %v1055 = vpack.c.b16 %v1013, %v1010
        %v1056 = vpack.c.b16 %v1017, %v1014
        %v1057 = vpack.c.b16 %v1018, %v1015
        %v1058 = vpack.c.b16 %v1019, %v1016
        %v1059 = vpack.c.b16 %v1023, %v1020
        %v1060 = vpack.c.b16 %v1024, %v1021
        %v1061 = vpack.c.b16 %v1025, %v1022
        %v1062 = vpack.c.b16 %v1029, %v1026
        %v1063 = vpack.c.b16 %v1030, %v1027
        %v1064 = vpack.c.b16 %v1031, %v1028
        %v1065 = vpack.c.b16 %v1035, %v1032
        %v1066 = vpack.c.b16 %v1036, %v1033
        %v1067 = vpack.c.b16 %v1037, %v1034
        %v1068 = vpack.c.b16 %v1041, %v1038
        %v1069 = vpack.c.b16 %v1042, %v1039
        %v1070 = vpack.c.b16 %v1043, %v1040
        %v1071 = vpack.c.b16 %v1047, %v1044
        %v1072 = vpack.c.b16 %v1048, %v1045
        %v1073 = vpack.c.b16 %v1049, %v1046
        %1098 = vmatpush.bf16.msra.mxu0 %v1071
        %1099 = vmatpush.bf16.msra.mxu0 %v1068
        %1100 = vmatpush.bf16.msra.mxu0 %v1065
        %1101 = vmatpush.bf16.msra.mxu0 %v1062
        %1102 = vmatpush.bf16.msra.mxu0 %v1059
        %1103 = vmatpush.bf16.msra.mxu0 %v1056
        %1104 = vmatpush.bf16.msra.mxu0 %v1053
        %1105 = vmatpush.bf16.msra.mxu0 %v1050
        %1106 = vmatmul.bf16.gmra.mxu0 %v929
        %v1107 = vpop.f32.mrf.mxu0
        %v1108 = vadd.f32 %v964, %v1107
        %v1109 = vpop.f32.mrf.mxu0
        %1110 = vdwg.mxu0
        %1111 = vmatpush.bf16.msra.mxu0 %v1072
        %1112 = vmatpush.bf16.msra.mxu0 %v1069
        %1113 = vmatpush.bf16.msra.mxu0 %v1066
        %1114 = vmatpush.bf16.msra.mxu0 %v1063
        %1115 = vmatpush.bf16.msra.mxu0 %v1060
        %1116 = vmatpush.bf16.msra.mxu0 %v1057
        %1117 = vmatpush.bf16.msra.mxu0 %v1054
        %1118 = vmatpush.bf16.msra.mxu0 %v1051
        %1119 = vmatmul.bf16.gmra.mxu0 %v929
        %v1120 = vpop.f32.mrf.mxu0
        %v1121 = vadd.f32 %v965, %v1120
        %v1122 = vpop.f32.mrf.mxu0
        %1123 = vdwg.mxu0
        %1124 = vmatpush.bf16.msra.mxu0 %v1073
        %1125 = vmatpush.bf16.msra.mxu0 %v1070
        %1126 = vmatpush.bf16.msra.mxu0 %v1067
        %1127 = vmatpush.bf16.msra.mxu0 %v1064
        %1128 = vmatpush.bf16.msra.mxu0 %v1061
        %1129 = vmatpush.bf16.msra.mxu0 %v1058
        %1130 = vmatpush.bf16.msra.mxu0 %v1055
        %1131 = vmatpush.bf16.msra.mxu0 %v1052
        %1132 = vmatmul.bf16.gmra.mxu0 %v929
        %v1133 = vpop.f32.mrf.mxu0
        %v1134 = vadd.f32 %v966, %v1133
        %v1135 = vpop.f32.mrf.mxu0
        %1136 = vdwg.mxu0
        %v1137 = vpack.c.bf16 %v1121, %v1108
        %v1138 = vpack.c.bf16 %v1134, %v1134
        %1140 = vrot.lane.b32.xlu0 %v1137, 96
        %v1141 = vpop.permute.xlu0 %1140
        %1142 = vrot.lane.b32.xlu0 %v1137, 64
        %v1143 = vpop.permute.xlu0 %1142
        %1144 = vrot.lane.b32.xlu0 %v1137, 32
        %v1145 = vpop.permute.xlu0 %1144
        %v1146 = vrot.slane %v1137, 4
        %v1147 = vrot.slane %v1141, 4
        %v1148 = vrot.slane %v1143, 4
        %v1149 = vrot.slane %v1145, 4
        %1151 = vrot.lane.b32.xlu0 %v1138, 96
        %v1152 = vpop.permute.xlu0 %1151
        %1153 = vrot.lane.b32.xlu0 %v1138, 64
        %v1154 = vpop.permute.xlu0 %1153
        %1155 = vrot.lane.b32.xlu0 %v1138, 32
        %v1156 = vpop.permute.xlu0 %1155
        %v1157 = vld [vmem:[%s727] sm:$0xf]
        %v1158 = vunpack.c.l.bf16 %v1157
        %vm1159 = vcmp.eq.f32.partialorder %v1158, 0.0
        %v1160 = vsel %vm1159, -1e+09, 0.0
        %vm1161 = vcmask 261120
        %v1163 = vsel %vm1161, %v1137, 0
        %v1166 = vsel %vm1161, %v1146, 0
        %1168 = vmatpush.bf16.xpose.msra.mxu0 0
        %1169 = vmatpush.bf16.xpose.msra.mxu0 0
        %1170 = vmatpush.bf16.xpose.msra.mxu0 0
        %1171 = vmatpush.bf16.xpose.msra.mxu0 0
        %1172 = vmatpush.bf16.xpose.msra.mxu0 0
        %1173 = vmatpush.bf16.xpose.msra.mxu0 0
        %1174 = vmatpush.bf16.xpose.msra.mxu0 0
        %1175 = vmatpush.bf16.xpose.msra.mxu0 %v1166
        %1176 = vmatmul.bf16.gmra.mxu0 %v1163
        %v1177 = vpop.f32.mrf.mxu0
        %v1178 = vadd.f32 0.0, %v1177
        %v1179 = vpop.f32.mrf.mxu0
        %1180 = vdwg.mxu0
        %v1182 = vsel %vm1161, %v1141, 0
        %v1185 = vsel %vm1161, %v1147, 0
        %1187 = vmatpush.bf16.xpose.msra.mxu0 0
        %1188 = vmatpush.bf16.xpose.msra.mxu0 0
        %1189 = vmatpush.bf16.xpose.msra.mxu0 0
        %1190 = vmatpush.bf16.xpose.msra.mxu0 0
        %1191 = vmatpush.bf16.xpose.msra.mxu0 0
        %1192 = vmatpush.bf16.xpose.msra.mxu0 0
        %1193 = vmatpush.bf16.xpose.msra.mxu0 0
        %1194 = vmatpush.bf16.xpose.msra.mxu0 %v1185
        %1195 = vmatmul.bf16.gmra.mxu0 %v1182
        %v1196 = vpop.f32.mrf.mxu0
        %v1197 = vadd.f32 0.0, %v1196
        %v1198 = vpop.f32.mrf.mxu0
        %1199 = vdwg.mxu0
        %v1201 = vsel %vm1161, %v1143, 0
        %v1204 = vsel %vm1161, %v1148, 0
        %1206 = vmatpush.bf16.xpose.msra.mxu0 0
        %1207 = vmatpush.bf16.xpose.msra.mxu0 0
        %1208 = vmatpush.bf16.xpose.msra.mxu0 0
        %1209 = vmatpush.bf16.xpose.msra.mxu0 0
        %1210 = vmatpush.bf16.xpose.msra.mxu0 0
        %1211 = vmatpush.bf16.xpose.msra.mxu0 0
        %1212 = vmatpush.bf16.xpose.msra.mxu0 0
        %1213 = vmatpush.bf16.xpose.msra.mxu0 %v1204
        %1214 = vmatmul.bf16.gmra.mxu0 %v1201
        %v1215 = vpop.f32.mrf.mxu0
        %v1216 = vadd.f32 0.0, %v1215
        %v1217 = vpop.f32.mrf.mxu0
        %1218 = vdwg.mxu0
        %v1220 = vsel %vm1161, %v1145, 0
        %v1223 = vsel %vm1161, %v1149, 0
        %1225 = vmatpush.bf16.xpose.msra.mxu0 0
        %1226 = vmatpush.bf16.xpose.msra.mxu0 0
        %1227 = vmatpush.bf16.xpose.msra.mxu0 0
        %1228 = vmatpush.bf16.xpose.msra.mxu0 0
        %1229 = vmatpush.bf16.xpose.msra.mxu0 0
        %1230 = vmatpush.bf16.xpose.msra.mxu0 0
        %1231 = vmatpush.bf16.xpose.msra.mxu0 0
        %1232 = vmatpush.bf16.xpose.msra.mxu0 %v1223
        %1233 = vmatmul.bf16.gmra.mxu0 %v1220
        %v1234 = vpop.f32.mrf.mxu0
        %v1235 = vadd.f32 0.0, %v1234
        %v1236 = vpop.f32.mrf.mxu0
        %1237 = vdwg.mxu0
        %v1238 = vmul.f32 %v1178, 0.17677669
        %v1239 = vmul.f32 %v1197, 0.17677669
        %v1240 = vmul.f32 %v1216, 0.17677669
        %v1241 = vmul.f32 %v1235, 0.17677669
        %v1242 = vadd.f32 %v1238, %v1160
        %v1243 = vadd.f32 %v1239, %v1160
        %v1244 = vadd.f32 %v1240, %v1160
        %v1245 = vadd.f32 %v1241, %v1160
        %vm1246 = vcmask 64512
        %v1247 = vsel %vm1246, %v1242, -inf
        %1248 = vmax.xlane.f32.xlu0 %v1247
        %v1249 = vpop.xlane.xlu0 %1248
        %v1250 = vsel %vm1246, %v1243, -inf
        %1251 = vmax.xlane.f32.xlu0 %v1250
        %v1252 = vpop.xlane.xlu0 %1251
        %v1253 = vsel %vm1246, %v1244, -inf
        %1254 = vmax.xlane.f32.xlu0 %v1253
        %v1255 = vpop.xlane.xlu0 %1254
        %v1256 = vsel %vm1246, %v1245, -inf
        %1257 = vmax.xlane.f32.xlu0 %v1256
        %v1258 = vpop.xlane.xlu0 %1257
        %v1259 = vsub.f32 %v1242, %v1249
        %v1260 = vsub.f32 %v1243, %v1252
        %v1261 = vsub.f32 %v1244, %v1255
        %v1262 = vsub.f32 %v1245, %v1258
        %v1263 = vmul.f32 %v1259, 1.442695
        %v1264 = vpow.pop %v1263
        %v1265 = vmul.f32 %v1260, 1.442695
        %v1266 = vpow.pop %v1265
        %v1267 = vmul.f32 %v1261, 1.442695
        %v1268 = vpow.pop %v1267
        %v1269 = vmul.f32 %v1262, 1.442695
        %v1270 = vpow.pop %v1269
        %v1271 = vsel %vm1246, %v1264, 0.0
        %1272 = vadd.xlane.f32.xlu0 %v1271
        %v1273 = vpop.xlane.xlu0 %1272
        %v1274 = vsel %vm1246, %v1266, 0.0
        %1275 = vadd.xlane.f32.xlu0 %v1274
        %v1276 = vpop.xlane.xlu0 %1275
        %v1277 = vsel %vm1246, %v1268, 0.0
        %1278 = vadd.xlane.f32.xlu0 %v1277
        %v1279 = vpop.xlane.xlu0 %1278
        %v1280 = vsel %vm1246, %v1270, 0.0
        %1281 = vadd.xlane.f32.xlu0 %v1280
        %v1282 = vpop.xlane.xlu0 %1281
        %v1283 = vrcp.pop %v1273
        %v1284 = vrcp.pop %v1276
        %v1285 = vrcp.pop %v1279
        %v1286 = vrcp.pop %v1282
        %v1287 = vmul.f32 %v1264, %v1283
        %v1288 = vmul.f32 %v1266, %v1284
        %v1289 = vmul.f32 %v1268, %v1285
        %v1290 = vmul.f32 %v1270, %v1286
        %v1291 = vpack.c.bf16 %v1287, %v1287
        %v1292 = vpack.c.bf16 %v1288, %v1288
        %v1293 = vpack.c.bf16 %v1289, %v1289
        %v1294 = vpack.c.bf16 %v1290, %v1290
        %v1296 = vsel %vm1246, %v1291, 0
        %vm1298 = vcmask 1043456
        %v1300 = vsel %vm1298, %v1138, 0
        %1302 = vmatpush.bf16.msra.mxu0 0
        %1303 = vmatpush.bf16.msra.mxu0 0
        %1304 = vmatpush.bf16.msra.mxu0 0
        %1305 = vmatpush.bf16.msra.mxu0 0
        %1306 = vmatpush.bf16.msra.mxu0 0
        %1307 = vmatpush.bf16.msra.mxu0 0
        %1308 = vmatpush.bf16.msra.mxu0 0
        %1309 = vmatpush.bf16.msra.mxu0 %v1300
        %1310 = vmatmul.bf16.gmra.mxu0 %v1296
        %v1311 = vpop.f32.mrf.mxu0
        %v1312 = vadd.f32 0.0, %v1311
        %v1313 = vpop.f32.mrf.mxu0
        %1314 = vdwg.mxu0
        %v1316 = vsel %vm1246, %v1292, 0
        %v1319 = vsel %vm1298, %v1152, 0
        %1321 = vmatpush.bf16.msra.mxu0 0
        %1322 = vmatpush.bf16.msra.mxu0 0
        %1323 = vmatpush.bf16.msra.mxu0 0
        %1324 = vmatpush.bf16.msra.mxu0 0
        %1325 = vmatpush.bf16.msra.mxu0 0
        %1326 = vmatpush.bf16.msra.mxu0 0
        %1327 = vmatpush.bf16.msra.mxu0 0
        %1328 = vmatpush.bf16.msra.mxu0 %v1319
        %1329 = vmatmul.bf16.gmra.mxu0 %v1316
        %v1330 = vpop.f32.mrf.mxu0
        %v1331 = vadd.f32 0.0, %v1330
        %v1332 = vpop.f32.mrf.mxu0
        %1333 = vdwg.mxu0
        %v1335 = vsel %vm1246, %v1293, 0
        %v1338 = vsel %vm1298, %v1154, 0
        %1340 = vmatpush.bf16.msra.mxu0 0
        %1341 = vmatpush.bf16.msra.mxu0 0
        %1342 = vmatpush.bf16.msra.mxu0 0
        %1343 = vmatpush.bf16.msra.mxu0 0
        %1344 = vmatpush.bf16.msra.mxu0 0
        %1345 = vmatpush.bf16.msra.mxu0 0
        %1346 = vmatpush.bf16.msra.mxu0 0
        %1347 = vmatpush.bf16.msra.mxu0 %v1338
        %1348 = vmatmul.bf16.gmra.mxu0 %v1335
        %v1349 = vpop.f32.mrf.mxu0
        %v1350 = vadd.f32 0.0, %v1349
        %v1351 = vpop.f32.mrf.mxu0
        %1352 = vdwg.mxu0
        %v1354 = vsel %vm1246, %v1294, 0
        %v1357 = vsel %vm1298, %v1156, 0
        %1359 = vmatpush.bf16.msra.mxu0 0
        %1360 = vmatpush.bf16.msra.mxu0 0
        %1361 = vmatpush.bf16.msra.mxu0 0
        %1362 = vmatpush.bf16.msra.mxu0 0
        %1363 = vmatpush.bf16.msra.mxu0 0
        %1364 = vmatpush.bf16.msra.mxu0 0
        %1365 = vmatpush.bf16.msra.mxu0 0
        %1366 = vmatpush.bf16.msra.mxu0 %v1357
        %1367 = vmatmul.bf16.gmra.mxu0 %v1354
        %v1368 = vpop.f32.mrf.mxu0
        %v1369 = vadd.f32 0.0, %v1368
        %v1370 = vpop.f32.mrf.mxu0
        %1371 = vdwg.mxu0
        %v1372 = vpack.c.bf16 %v1312, %v1312
        %v1373 = vpack.c.bf16 %v1331, %v1331
        %v1374 = vpack.c.bf16 %v1350, %v1350
        %v1375 = vpack.c.bf16 %v1369, %v1369
        %v1377 = vunpack.c.l.b16 %v1373
        %v1378 = vpack.c.b16 %v1377, %v1377
        %1379 = vrot.lane.b32.xlu0 %v1378, 32
        %v1380 = vpop.permute.xlu0 %1379
        %v1382 = vunpack.c.l.b16 %v1374
        %v1383 = vpack.c.b16 %v1382, %v1382
        %1384 = vrot.lane.b32.xlu0 %v1383, 64
        %v1385 = vpop.permute.xlu0 %1384
        %v1387 = vunpack.c.l.b16 %v1375
        %v1388 = vpack.c.b16 %v1387, %v1387
        %1389 = vrot.lane.b32.xlu0 %v1388, 96
        %v1390 = vpop.permute.xlu0 %1389
        %v1393 = vsel %vm1161, %v1372, %v1380
        %vm1394 = vcmask 523264
        %v1396 = vsel %vm1394, %v1393, %v1385
        %vm1397 = vcmask 785408
        %v1399 = vsel %vm1397, %v1396, %v1390
        %v1401 = vld [vmem:[%s762] sm:$0xf]
        %v1402 = vld [vmem:[%s762 + $0x4] sm:$0xf]
        %v1403 = vld [vmem:[%s762 + $0x8] sm:$0xf]
        %v1404 = vld [vmem:[%s762 + $0xc] sm:$0xf]
        %v1405 = vld [vmem:[%s762 + $0x10] sm:$0xf]
        %v1406 = vld [vmem:[%s762 + $0x14] sm:$0xf]
        %v1407 = vld [vmem:[%s762 + $0x18] sm:$0xf]
        %v1408 = vld [vmem:[%s762 + $0x1c] sm:$0xf]
        %v1409 = vld [vmem:[%s762 + $0x20] sm:$0xf]
        %v1410 = vld [vmem:[%s762 + $0x24] sm:$0xf]
        %v1411 = vld [vmem:[%s762 + $0x28] sm:$0xf]
        %v1412 = vld [vmem:[%s762 + $0x2c] sm:$0xf]
        %v1413 = vld [vmem:[%s762 + $0x30] sm:$0xf]
        %v1414 = vld [vmem:[%s762 + $0x34] sm:$0xf]
        %v1415 = vld [vmem:[%s762 + $0x38] sm:$0xf]
        %v1416 = vld [vmem:[%s762 + $0x3c] sm:$0xf]
        %v1417 = vld [vmem:[%s904] sm:$0x1]
        %v1419 = vperm.slane %v1417, 0
        %v1437 = vunpack.c.l.b16 %v1401
        %v1438 = vunpack.c.l.b16 %v1402
        %v1439 = vunpack.c.l.b16 %v1403
        %v1440 = vunpack.c.l.b16 %v1404
        %v1441 = vunpack.c.l.b16 %v1405
        %v1442 = vunpack.c.l.b16 %v1406
        %v1443 = vunpack.c.l.b16 %v1407
        %v1444 = vunpack.c.l.b16 %v1408
        %v1445 = vunpack.c.l.b16 %v1409
        %v1446 = vunpack.c.l.b16 %v1410
        %v1447 = vunpack.c.l.b16 %v1411
        %v1448 = vunpack.c.l.b16 %v1412
        %v1449 = vunpack.c.l.b16 %v1413
        %v1450 = vunpack.c.l.b16 %v1414
        %v1451 = vunpack.c.l.b16 %v1415
        %v1452 = vunpack.c.l.b16 %v1416
        %v1453 = vpack.c.b16 %v1438, %v1437
        %v1454 = vpack.c.b16 %v1440, %v1439
        %v1455 = vpack.c.b16 %v1442, %v1441
        %v1456 = vpack.c.b16 %v1444, %v1443
        %v1457 = vpack.c.b16 %v1446, %v1445
        %v1458 = vpack.c.b16 %v1448, %v1447
        %v1459 = vpack.c.b16 %v1450, %v1449
        %v1460 = vpack.c.b16 %v1452, %v1451
        %1469 = vmatpush.bf16.msra.mxu0 %v1460
        %1470 = vmatpush.bf16.msra.mxu0 %v1459
        %1471 = vmatpush.bf16.msra.mxu0 %v1458
        %1472 = vmatpush.bf16.msra.mxu0 %v1457
        %1473 = vmatpush.bf16.msra.mxu0 %v1456
        %1474 = vmatpush.bf16.msra.mxu0 %v1455
        %1475 = vmatpush.bf16.msra.mxu0 %v1454
        %1476 = vmatpush.bf16.msra.mxu0 %v1453
        %1477 = vmatmul.bf16.gmra.mxu0 %v1399
        %v1478 = vpop.f32.mrf.mxu0
        %v1479 = vadd.f32 %v1419, %v1478
        %v1480 = vpop.f32.mrf.mxu0
        %1481 = vdwg.mxu0
        %v1482 = vadd.f32 %v928, %v1479
        %v1483 = vld [vmem:[%s771] sm:$0x1]
        %v1484 = vld [vmem:[%s780] sm:$0x1]
        %1485 = vadd.xlane.f32.xlu0 %v1482
        %v1486 = vpop.xlane.xlu0 %1485
        %v1487 = vrcp.pop 128.0
        %v1488 = vmul.f32 128.0, %v1487
        %v1489 = vsub.f32 1.0, %v1488
        %v1490 = vmul.f32 %v1487, %v1489
        %v1491 = vadd.f32 %v1487, %v1490
        %vm1492 = vweird.f32 %v1487
        %v1493 = vsel %vm1492, %v1487, %v1491
        %v1494 = vmul.f32 %v1486, %v1493
        %v1495 = vsub.f32 %v1482, %v1494
        %v1496 = vmul.f32 %v1495, %v1495
        %1497 = vadd.xlane.f32.xlu0 %v1496
        %v1498 = vpop.xlane.xlu0 %1497
        %v1499 = vmul.f32 %v1498, %v1493
        %v1500 = vadd.f32 %v1499, 1e-05
        %v1501 = vrsqrt.pop %v1500
        %v1502 = vmul.f32 %v1501, %v1500
        %v1503 = vmul.f32 %v1502, %v1501
        %v1504 = vmul.f32 0.5, %v1503
        %v1505 = vsub.f32 1.5, %v1504
        %v1506 = vmul.f32 %v1501, %v1505
        %vm1507 = vweird.f32 %v1500
        %vm1508 = vweird.f32 %v1501
        %vm1509 = vmor %vm1507, %vm1508
        %v1510 = vsel %vm1509, %v1501, %v1506
        %v1511 = vmul.f32 %v1495, %v1510
        %v1513 = vperm.slane %v1483, 0
        %v1515 = vmul.f32 %v1511, %v1513
        %v1517 = vperm.slane %v1484, 0
        %v1519 = vadd.f32 %v1515, %v1517
        %v1520 = vpack.c.bf16 %v1519, %v1519
        %v1521 = vld [vmem:[%s790] sm:$0xff]
        %v1522 = vld [vmem:[%s790 + $0x8] sm:$0xff]
        %v1523 = vld [vmem:[%s790 + $0x10] sm:$0xff]
        %v1524 = vld [vmem:[%s790 + $0x18] sm:$0xff]
        %v1525 = vld [vmem:[%s790 + $0x20] sm:$0xff]
        %v1526 = vld [vmem:[%s790 + $0x28] sm:$0xff]
        %v1527 = vld [vmem:[%s790 + $0x30] sm:$0xff]
        %v1528 = vld [vmem:[%s790 + $0x38] sm:$0xff]
        %v1529 = vld [vmem:[%s790 + $0x40] sm:$0xff]
        %v1530 = vld [vmem:[%s790 + $0x48] sm:$0xff]
        %v1531 = vld [vmem:[%s790 + $0x50] sm:$0xff]
        %v1532 = vld [vmem:[%s790 + $0x58] sm:$0xff]
        %v1533 = vld [vmem:[%s790 + $0x60] sm:$0xff]
        %v1534 = vld [vmem:[%s790 + $0x68] sm:$0xff]
        %v1535 = vld [vmem:[%s790 + $0x70] sm:$0xff]
        %v1536 = vld [vmem:[%s790 + $0x78] sm:$0xff]
        %v1537 = vld [vmem:[%s908] sm:$0x3]
        %v1539 = vperm.slane %v1537, 0
        %v1540 = vperm.slane %v1537, 1
        %v1559 = vunpack.c.l.b16 %v1521
        %v1560 = vunpack.c.h.b16 %v1521
        %v1561 = vunpack.c.l.b16 %v1522
        %v1562 = vunpack.c.h.b16 %v1522
        %v1563 = vunpack.c.l.b16 %v1523
        %v1564 = vunpack.c.h.b16 %v1523
        %v1565 = vunpack.c.l.b16 %v1524
        %v1566 = vunpack.c.h.b16 %v1524
        %v1567 = vunpack.c.l.b16 %v1525
        %v1568 = vunpack.c.h.b16 %v1525
        %v1569 = vunpack.c.l.b16 %v1526
        %v1570 = vunpack.c.h.b16 %v1526
        %v1571 = vunpack.c.l.b16 %v1527
        %v1572 = vunpack.c.h.b16 %v1527
        %v1573 = vunpack.c.l.b16 %v1528
        %v1574 = vunpack.c.h.b16 %v1528
        %v1575 = vunpack.c.l.b16 %v1529
        %v1576 = vunpack.c.h.b16 %v1529
        %v1577 = vunpack.c.l.b16 %v1530
        %v1578 = vunpack.c.h.b16 %v1530
        %v1579 = vunpack.c.l.b16 %v1531
        %v1580 = vunpack.c.h.b16 %v1531
        %v1581 = vunpack.c.l.b16 %v1532
        %v1582 = vunpack.c.h.b16 %v1532
        %v1583 = vunpack.c.l.b16 %v1533
        %v1584 = vunpack.c.h.b16 %v1533
        %v1585 = vunpack.c.l.b16 %v1534
        %v1586 = vunpack.c.h.b16 %v1534
        %v1587 = vunpack.c.l.b16 %v1535
        %v1588 = vunpack.c.h.b16 %v1535
        %v1589 = vunpack.c.l.b16 %v1536
        %v1590 = vunpack.c.h.b16 %v1536
        %v1591 = vpack.c.b16 %v1561, %v1559
        %v1592 = vpack.c.b16 %v1562, %v1560
        %v1593 = vpack.c.b16 %v1565, %v1563
        %v1594 = vpack.c.b16 %v1566, %v1564
        %v1595 = vpack.c.b16 %v1569, %v1567
        %v1596 = vpack.c.b16 %v1570, %v1568
        %v1597 = vpack.c.b16 %v1573, %v1571
        %v1598 = vpack.c.b16 %v1574, %v1572
        %v1599 = vpack.c.b16 %v1577, %v1575
        %v1600 = vpack.c.b16 %v1578, %v1576
        %v1601 = vpack.c.b16 %v1581, %v1579
        %v1602 = vpack.c.b16 %v1582, %v1580
        %v1603 = vpack.c.b16 %v1585, %v1583
        %v1604 = vpack.c.b16 %v1586, %v1584
        %v1605 = vpack.c.b16 %v1589, %v1587
        %v1606 = vpack.c.b16 %v1590, %v1588
        %1623 = vmatpush.bf16.msra.mxu0 %v1605
        %1624 = vmatpush.bf16.msra.mxu0 %v1603
        %1625 = vmatpush.bf16.msra.mxu0 %v1601
        %1626 = vmatpush.bf16.msra.mxu0 %v1599
        %1627 = vmatpush.bf16.msra.mxu0 %v1597
        %1628 = vmatpush.bf16.msra.mxu0 %v1595
        %1629 = vmatpush.bf16.msra.mxu0 %v1593
        %1630 = vmatpush.bf16.msra.mxu0 %v1591
        %1631 = vmatmul.bf16.gmra.mxu0 %v1520
        %v1632 = vpop.f32.mrf.mxu0
        %v1633 = vadd.f32 %v1539, %v1632
        %v1634 = vpop.f32.mrf.mxu0
        %1635 = vdwg.mxu0
        %1636 = vmatpush.bf16.msra.mxu0 %v1606
        %1637 = vmatpush.bf16.msra.mxu0 %v1604
        %1638 = vmatpush.bf16.msra.mxu0 %v1602
        %1639 = vmatpush.bf16.msra.mxu0 %v1600
        %1640 = vmatpush.bf16.msra.mxu0 %v1598
        %1641 = vmatpush.bf16.msra.mxu0 %v1596
        %1642 = vmatpush.bf16.msra.mxu0 %v1594
        %1643 = vmatpush.bf16.msra.mxu0 %v1592
        %1644 = vmatmul.bf16.gmra.mxu0 %v1520
        %v1645 = vpop.f32.mrf.mxu0
        %v1646 = vadd.f32 %v1540, %v1645
        %v1647 = vpop.f32.mrf.mxu0
        %1648 = vdwg.mxu0
        %v1649 = vmax.f32 %v1633, 0.0
        %v1650 = vmax.f32 %v1646, 0.0
        %v1651 = vpack.c.bf16 %v1649, %v1649
        %v1652 = vpack.c.bf16 %v1650, %v1650
        %v1653 = vld [vmem:[%s800] sm:$0xf]
        %v1654 = vld [vmem:[%s800 + $0x4] sm:$0xf]
        %v1655 = vld [vmem:[%s800 + $0x8] sm:$0xf]
        %v1656 = vld [vmem:[%s800 + $0xc] sm:$0xf]
        %v1657 = vld [vmem:[%s800 + $0x10] sm:$0xf]
        %v1658 = vld [vmem:[%s800 + $0x14] sm:$0xf]
        %v1659 = vld [vmem:[%s800 + $0x18] sm:$0xf]
        %v1660 = vld [vmem:[%s800 + $0x1c] sm:$0xf]
        %v1661 = vld [vmem:[%s800 + $0x20] sm:$0xf]
        %v1662 = vld [vmem:[%s800 + $0x24] sm:$0xf]
        %v1663 = vld [vmem:[%s800 + $0x28] sm:$0xf]
        %v1664 = vld [vmem:[%s800 + $0x2c] sm:$0xf]
        %v1665 = vld [vmem:[%s800 + $0x30] sm:$0xf]
        %v1666 = vld [vmem:[%s800 + $0x34] sm:$0xf]
        %v1667 = vld [vmem:[%s800 + $0x38] sm:$0xf]
        %v1668 = vld [vmem:[%s800 + $0x3c] sm:$0xf]
        %v1669 = vld [vmem:[%s800 + $0x40] sm:$0xf]
        %v1670 = vld [vmem:[%s800 + $0x44] sm:$0xf]
        %v1671 = vld [vmem:[%s800 + $0x48] sm:$0xf]
        %v1672 = vld [vmem:[%s800 + $0x4c] sm:$0xf]
        %v1673 = vld [vmem:[%s800 + $0x50] sm:$0xf]
        %v1674 = vld [vmem:[%s800 + $0x54] sm:$0xf]
        %v1675 = vld [vmem:[%s800 + $0x58] sm:$0xf]
        %v1676 = vld [vmem:[%s800 + $0x5c] sm:$0xf]
        %v1677 = vld [vmem:[%s800 + $0x60] sm:$0xf]
        %v1678 = vld [vmem:[%s800 + $0x64] sm:$0xf]
        %v1679 = vld [vmem:[%s800 + $0x68] sm:$0xf]
        %v1680 = vld [vmem:[%s800 + $0x6c] sm:$0xf]
        %v1681 = vld [vmem:[%s800 + $0x70] sm:$0xf]
        %v1682 = vld [vmem:[%s800 + $0x74] sm:$0xf]
        %v1683 = vld [vmem:[%s800 + $0x78] sm:$0xf]
        %v1684 = vld [vmem:[%s800 + $0x7c] sm:$0xf]
        %v1685 = vld [vmem:[%s911] sm:$0x1]
        %v1687 = vperm.slane %v1685, 0
        %v1721 = vunpack.c.l.b16 %v1653
        %v1722 = vunpack.c.l.b16 %v1654
        %v1723 = vunpack.c.l.b16 %v1655
        %v1724 = vunpack.c.l.b16 %v1656
        %v1725 = vunpack.c.l.b16 %v1657
        %v1726 = vunpack.c.l.b16 %v1658
        %v1727 = vunpack.c.l.b16 %v1659
        %v1728 = vunpack.c.l.b16 %v1660
        %v1729 = vunpack.c.l.b16 %v1661
        %v1730 = vunpack.c.l.b16 %v1662
        %v1731 = vunpack.c.l.b16 %v1663
        %v1732 = vunpack.c.l.b16 %v1664
        %v1733 = vunpack.c.l.b16 %v1665
        %v1734 = vunpack.c.l.b16 %v1666
        %v1735 = vunpack.c.l.b16 %v1667
        %v1736 = vunpack.c.l.b16 %v1668
        %v1737 = vunpack.c.l.b16 %v1669
        %v1738 = vunpack.c.l.b16 %v1670
        %v1739 = vunpack.c.l.b16 %v1671
        %v1740 = vunpack.c.l.b16 %v1672
        %v1741 = vunpack.c.l.b16 %v1673
        %v1742 = vunpack.c.l.b16 %v1674
        %v1743 = vunpack.c.l.b16 %v1675
        %v1744 = vunpack.c.l.b16 %v1676
        %v1745 = vunpack.c.l.b16 %v1677
        %v1746 = vunpack.c.l.b16 %v1678
        %v1747 = vunpack.c.l.b16 %v1679
        %v1748 = vunpack.c.l.b16 %v1680
        %v1749 = vunpack.c.l.b16 %v1681
        %v1750 = vunpack.c.l.b16 %v1682
        %v1751 = vunpack.c.l.b16 %v1683
        %v1752 = vunpack.c.l.b16 %v1684
        %v1753 = vpack.c.b16 %v1722, %v1721
        %v1754 = vpack.c.b16 %v1724, %v1723
        %v1755 = vpack.c.b16 %v1726, %v1725
        %v1756 = vpack.c.b16 %v1728, %v1727
        %v1757 = vpack.c.b16 %v1730, %v1729
        %v1758 = vpack.c.b16 %v1732, %v1731
        %v1759 = vpack.c.b16 %v1734, %v1733
        %v1760 = vpack.c.b16 %v1736, %v1735
        %v1761 = vpack.c.b16 %v1738, %v1737
        %v1762 = vpack.c.b16 %v1740, %v1739
        %v1763 = vpack.c.b16 %v1742, %v1741
        %v1764 = vpack.c.b16 %v1744, %v1743
        %v1765 = vpack.c.b16 %v1746, %v1745
        %v1766 = vpack.c.b16 %v1748, %v1747
        %v1767 = vpack.c.b16 %v1750, %v1749
        %v1768 = vpack.c.b16 %v1752, %v1751
        %1785 = vmatpush.bf16.msra.mxu0 %v1760
        %1786 = vmatpush.bf16.msra.mxu0 %v1759
        %1787 = vmatpush.bf16.msra.mxu0 %v1758
        %1788 = vmatpush.bf16.msra.mxu0 %v1757
        %1789 = vmatpush.bf16.msra.mxu0 %v1756
        %1790 = vmatpush.bf16.msra.mxu0 %v1755
        %1791 = vmatpush.bf16.msra.mxu0 %v1754
        %1792 = vmatpush.bf16.msra.mxu0 %v1753
        %1793 = vmatmul.bf16.gmra.mxu0 %v1651
        %v1794 = vpop.f32.mrf.mxu0
        %v1795 = vadd.f32 %v1687, %v1794
        %v1796 = vpop.f32.mrf.mxu0
        %1797 = vdwg.mxu0
        %1798 = vmatpush.bf16.msra.mxu0 %v1768
        %1799 = vmatpush.bf16.msra.mxu0 %v1767
        %1800 = vmatpush.bf16.msra.mxu0 %v1766
        %1801 = vmatpush.bf16.msra.mxu0 %v1765
        %1802 = vmatpush.bf16.msra.mxu0 %v1764
        %1803 = vmatpush.bf16.msra.mxu0 %v1763
        %1804 = vmatpush.bf16.msra.mxu0 %v1762
        %1805 = vmatpush.bf16.msra.mxu0 %v1761
        %1806 = vmatmul.bf16.gmra.mxu0 %v1652
        %v1807 = vpop.f32.mrf.mxu0
        %v1808 = vadd.f32 %v1795, %v1807
        %v1809 = vpop.f32.mrf.mxu0
        %1810 = vdwg.mxu0
        %v1811 = vadd.f32 %v1519, %v1808
        %v1812 = vld [vmem:[%s914] sm:$0x1]
        %v1813 = vld [vmem:[%s917] sm:$0x1]
        %1814 = vadd.xlane.f32.xlu0 %v1811
        %v1815 = vpop.xlane.xlu0 %1814
        %v1816 = vmul.f32 %v1815, %v1493
        %v1817 = vsub.f32 %v1811, %v1816
        %v1818 = vmul.f32 %v1817, %v1817
        %1819 = vadd.xlane.f32.xlu0 %v1818
        %v1820 = vpop.xlane.xlu0 %1819
        %v1821 = vmul.f32 %v1820, %v1493
        %v1822 = vadd.f32 %v1821, 1e-05
        %v1823 = vrsqrt.pop %v1822
        %v1824 = vmul.f32 %v1823, %v1822
        %v1825 = vmul.f32 %v1824, %v1823
        %v1826 = vmul.f32 0.5, %v1825
        %v1827 = vsub.f32 1.5, %v1826
        %v1828 = vmul.f32 %v1823, %v1827
        %vm1829 = vweird.f32 %v1822
        %vm1830 = vweird.f32 %v1823
        %vm1831 = vmor %vm1829, %vm1830
        %v1832 = vsel %vm1831, %v1823, %v1828
        %v1833 = vmul.f32 %v1817, %v1832
        %v1835 = vperm.slane %v1812, 0
        %v1837 = vmul.f32 %v1833, %v1835
        %v1839 = vperm.slane %v1813, 0
        %v1841 = vadd.f32 %v1837, %v1839
        %1842 = vst [vmem:[#allocation2] sm:$0xff] %v1841
        %p1843 = scmp.eq.s32.totalorder %s52, 1
        // Predicated region
        $region125: #{tpu_custom_call.1} parent=79 // pred_check
          %p1844 = pneg %p1843
        $region126: #{tpu_custom_call.1} parent=79 // pred_check_branch
          %1846 = sbr.rel (%p1844) target = $region128
        $region127: #{tpu_custom_call.1} parent=79 // pred_region
          %1847 = vst [vmem:[%s901] sm:$0xff] %v1841
        $region128: #{tpu_custom_call.1} parent=79 // pred_fallthru
          _
        %s1848 = sand.u32 %s452, 1
        %s1849 = scalar_lea.sflag [#allocation5], %s1848
        %s1850 = sand.u32 %s452, 1
        %s1851 = smul.addr %s1850, 8
        %s1852 = scalar_lea.vmem [#allocation20], %s1851
        // Predicated region
        $region129: #{tpu_custom_call.1} parent=79 // pred_check
          %p1853 = pneg %p462
        $region130: #{tpu_custom_call.1} parent=79 // pred_check_branch
          %1855 = sbr.rel (%p1853) target = $region132
        $region131: #{tpu_custom_call.1} parent=79 // pred_region
          %1857 = vsyncadd %s1849, 0
          %s1858 = smul.addr %s51, 8
          %s1859 = scalar_lea.hbm %s15, %s1858
          %s1861 = sshll.u32 %s1852, 4
          %s1862 = int_to_ptr.vmem [resolvable:$true] %s1861
          %s1863 = sshll.u32 %s1859, 4
          %s1864 = int_to_ptr.hbm [resolvable:$true] %s1863
          %1866 = dma.vmem_to_hbm [thread:$0]  %s1862, 128, %s1864, %s1849
        $region132: #{tpu_custom_call.1} parent=79 // pred_fallthru
          _
      $region80: #{tpu_custom_call.1} parent=5 // pred_fallthru
        _
      %p1867 = scmp.le.s32.totalorder 2, %s42
      // Predicated region
      $region133: #{tpu_custom_call.1} parent=5 // pred_check
        %p1868 = pneg %p1867
      $region134: #{tpu_custom_call.1} parent=5 // pred_check_branch
        %1870 = sbr.rel (%p1868) target = $region136
      $region135: #{tpu_custom_call.1} parent=5 // pred_region
        %s1871 = ssub.s32 %s42, 2
        // Predicated region
        $region137: #{tpu_custom_call.1} parent=135 // pred_check
          %p1872 = pneg %p468
        $region138: #{tpu_custom_call.1} parent=135 // pred_check_branch
          %1874 = sbr.rel (%p1872) target = $region140
        $region139: #{tpu_custom_call.1} parent=135 // pred_region
          %s1875 = sand.u32 %s453, 1
          %s1876 = scalar_lea.sflag [#allocation5], %s1875
          %s1877 = sand.u32 %s453, 1
          %s1878 = smul.addr %s1877, 8
          %s1879 = scalar_lea.vmem [#allocation20], %s1878
          %1881 = dma.done %s1876, 128
        $region140: #{tpu_custom_call.1} parent=135 // pred_fallthru
          _
      $region136: #{tpu_custom_call.1} parent=5 // pred_fallthru
        _
    $region6: #{tpu_custom_call.1} parent=1 // loop_footer
      %s46 = sadd.s32 1, %s42
    $region7: #{tpu_custom_call.1} parent=1 // loop_footer_branch
      %41 = sbr.rel target = $region3
    $region8: #{tpu_custom_call.1} parent=1 // loop_exit
      _
    %1882 = vsyncpa [#allocation4], 1
    %s1883 = scalar_lea.sflag [#allocation4], 1
    %1884 = vsyncpa %s1883, 1
    %1885 = vsyncpa [#allocation7], 1
    %s1886 = scalar_lea.sflag [#allocation7], 1
    %1887 = vsyncpa %s1886, 1
    %1888 = vsyncpa [#allocation10], 1
    %s1889 = scalar_lea.sflag [#allocation10], 1
    %1890 = vsyncpa %s1889, 1
    %1891 = vsyncpa [#allocation13], 1
    %s1892 = scalar_lea.sflag [#allocation13], 1
    %1893 = vsyncpa %s1892, 1
    %1894 = vsyncpa [#allocation16], 1
    %s1895 = scalar_lea.sflag [#allocation16], 1
    %1896 = vsyncpa %s1895, 1
    %1897 = vsyncpa [#allocation19], 1
    %s1898 = scalar_lea.sflag [#allocation19], 1
    %1899 = vsyncpa %s1898, 1
    %1900 = vsyncpa [#allocation5], 1
    %s1901 = scalar_lea.sflag [#allocation5], 1
    %1902 = vsyncpa %s1901, 1

</llo_original>
